<compile_context>
chip_gen: v6e
topology: v6e:2x2x1
jax: 0.10.0
libtpu: 0.0.40
codegen_flags: <defaults>
</compile_context>

<pallas_src>
import functools
import math

import jax
import jax.numpy as jnp
from jax.experimental import pallas as pl
from jax.experimental.pallas import tpu as pltpu


def attn_only_block_kernel(x_ref, pos_ref, wq_ref, wk_ref, wv_ref, wo_ref, out_ref,
                           z_scr, *, n_heads, d_head, mxu_dtype):
    """Per-batch-element forward (grid axis 0 = batch, "parallel").

    x_ref, pos_ref : (S, D)     residual stream / positional embedding (f32)
    wq/wk/wv_ref   : (H, D, dh) per-head projections (1/sqrt(dh) folded into W_Q), MXU dtype
    wo_ref         : (H*dh, D)  output projection, head-major rows, MXU dtype
    out_ref        : (S, D)     resid_post
    z_scr          : (S, H*dh)  f32 VMEM staging buffer for the single W_O GEMM
    """
    seq, d_model = x_ref.shape

    x = x_ref[...]                                   # resid_pre (f32)
    qk_in = x + pos_ref[...]                         # hook_qk_input (f32)

    # Head-batched projections: lhs broadcast along the head axis; weights already (H, D, dh).
    # Every einsum below is a plain batch-leading matmul (no in-kernel lane-dim reshapes,
    # no per-head 8-lane slicing of q/k/v).
    xb = jnp.broadcast_to(x.astype(mxu_dtype)[None], (n_heads, seq, d_model))
    qkb = jnp.broadcast_to(qk_in.astype(mxu_dtype)[None], (n_heads, seq, d_model))

    q = jnp.einsum('hpd,hde->hpe', qkb, wq_ref[...], preferred_element_type=jnp.float32)
    k = jnp.einsum('hpd,hde->hpe', qkb, wk_ref[...], preferred_element_type=jnp.float32)
    v = jnp.einsum('hpd,hde->hpe', xb, wv_ref[...], preferred_element_type=jnp.float32)

    # All heads at once: scores, in-kernel causal mask (no O(S^2) bias input), softmax in f32.
    s = jnp.einsum('hpe,hqe->hpq', q.astype(mxu_dtype), k.astype(mxu_dtype),
                   preferred_element_type=jnp.float32)              # (H, S, S) f32
    row = jax.lax.broadcasted_iota(jnp.int32, (seq, seq), 0)        # query position
    col = jax.lax.broadcasted_iota(jnp.int32, (seq, seq), 1)        # key position
    s = jnp.where(col <= row, s, -100000.0)                         # IGNORE = -1e5 (reference)
    s = s - jnp.max(s, axis=-1, keepdims=True)
    e = jnp.exp(s)
    attn = e * pl.reciprocal(jnp.sum(e, axis=-1, keepdims=True), approx=True)

    z = jnp.einsum('hpq,hqe->hpe', attn.astype(mxu_dtype), v.astype(mxu_dtype),
                   preferred_element_type=jnp.float32)              # (H, S, dh) f32

    # Stage z head-contiguously -> ONE W_O GEMM with K = H*dh (head reduction in the MXU
    # f32 accumulator; the running VPU accumulator from the previous version is gone).
    for h in range(n_heads):                                        # static: data movement only
        z_scr[:, h * d_head:(h + 1) * d_head] = z[h]
    attn_out = jnp.dot(z_scr[...].astype(mxu_dtype), wo_ref[...],
                       preferred_element_type=jnp.float32)          # (S, D)

    # TODO(synk): at real shapes make this store lane-dense (D padded/kept a multiple of 128).
    out_ref[...] = (x + attn_out).astype(out_ref.dtype)             # resid_post


@functools.partial(jax.jit, static_argnames=("mxu_dtype",))
def attn_only_block(x, pos_embed, w_q, w_k, w_v, w_o, *, mxu_dtype=jnp.float32):
    B, S, D = x.shape
    H, dh, _ = w_q.shape
    hd = H * dh

    # Wrapper-side weight re-layout (done once by XLA; no transposes inside the kernel):
    #   W_Q/W_K/W_V (H, dh, D) -> (H, D, dh);  W_O (H, D, dh) -> (H*dh, D).
    # 1/sqrt(d_head) is folded into W_Q; weights are pre-cast to the MXU operand dtype
    # (use bf16 on v5e/v6e/v7x; softmax / residual math stays f32 in-kernel).
    scale = 1.0 / math.sqrt(dh)
    wq3 = jnp.transpose(w_q * scale, (0, 2, 1)).astype(mxu_dtype)        # (H, D, dh)
    wk3 = jnp.transpose(w_k, (0, 2, 1)).astype(mxu_dtype)                # (H, D, dh)
    wv3 = jnp.transpose(w_v, (0, 2, 1)).astype(mxu_dtype)                # (H, D, dh)
    wo2 = jnp.transpose(w_o, (0, 2, 1)).reshape(hd, D).astype(mxu_dtype)  # (H*dh, D)

    kernel = functools.partial(attn_only_block_kernel,
                               n_heads=H, d_head=dh, mxu_dtype=mxu_dtype)

    row_spec = pl.BlockSpec((None, S, D), lambda b: (b, 0, 0))      # one batch element / program
    head_w_spec = pl.BlockSpec((H, D, dh), lambda b: (0, 0, 0))     # weights resident across grid

    grid_spec = pltpu.PrefetchScalarGridSpec(
        num_scalar_prefetch=0,
        grid=(B,),                                                  # batch-parallel grid
        in_specs=[row_spec, row_spec,
                  head_w_spec, head_w_spec, head_w_spec,
                  pl.BlockSpec((hd, D), lambda b: (0, 0))],
        out_specs=row_spec,
        scratch_shapes=[pltpu.VMEM((S, hd), jnp.float32)],
    )

    out = pl.pallas_call(
        kernel,
        grid_spec=grid_spec,
        out_shape=jax.ShapeDtypeStruct((B, S, D), x.dtype),
        input_output_aliases={0: 0},        # resid_post reuses x's buffer (pure residual update)
        compiler_params=pltpu.CompilerParams(dimension_semantics=("parallel",)),
    )(x, pos_embed, wq3, wk3, wv3, wo2)
    return out


def _kaiming_uniform(key, shape, a=math.sqrt(5)):
    # matches torch.nn.init.kaiming_uniform_ bound for a 3-D weight:
    # fan_in = shape[1] * shape[2], gain = sqrt(2 / (1 + a^2)), bound = gain * sqrt(3 / fan_in)
    fan_in = shape[1] * shape[2]
    gain = math.sqrt(2.0 / (1.0 + a * a))
    bound = gain * math.sqrt(3.0 / fan_in)
    return jax.random.uniform(key, shape, jnp.float32, minval=-bound, maxval=bound)


def _reference(x, pos_embed, w_q, w_k, w_v, w_o):
    qk_input = x + pos_embed
    q = jnp.einsum('ihm,bpm->bpih', w_q, qk_input)
    k = jnp.einsum('ihm,bpm->bpih', w_k, qk_input)
    v = jnp.einsum('ihm,bpm->bpih', w_v, x)
    scores = jnp.einsum('bpih,bqih->bipq', q, k) / math.sqrt(w_q.shape[1])
    S = x.shape[1]
    mask = jnp.tril(jnp.ones((S, S), dtype=bool))
    scores = jnp.where(mask, scores, -100000.0)
    attn = jax.nn.softmax(scores, axis=-1)
    z = jnp.einsum('bpih,biqp->bqih', v, attn)
    out = jnp.einsum('imh,bqih->bqm', w_o, z)
    return x + out


if __name__ == "__main__":
    cfg = dict(n_heads=4, d_head=8, d_model=32, n_ctx=8, use_attn_result=False)
    batch, seq = 2, cfg['n_ctx']

    key = jax.random.PRNGKey(0)
    kx, kp, kq, kk, kv, ko = jax.random.split(key, 6)

    x = jax.random.normal(kx, (batch, seq, cfg['d_model']), jnp.float32)
    pos_embed = jax.random.normal(kp, (batch, seq, cfg['d_model']), jnp.float32)

    w_q = _kaiming_uniform(kq, (cfg['n_heads'], cfg['d_head'], cfg['d_model']))
    w_k = _kaiming_uniform(kk, (cfg['n_heads'], cfg['d_head'], cfg['d_model']))
    w_v = _kaiming_uniform(kv, (cfg['n_heads'], cfg['d_head'], cfg['d_model']))
    w_o = _kaiming_uniform(ko, (cfg['n_heads'], cfg['d_model'], cfg['d_head']))

    ref = _reference(x, pos_embed, w_q, w_k, w_v, w_o)

    # f32-MXU path: tight check (tolerance only accommodates the approx EUP reciprocal).
    out = jax.block_until_ready(attn_only_block(x, pos_embed, w_q, w_k, w_v, w_o))
    assert out.shape == ref.shape and out.dtype == ref.dtype
    assert jnp.allclose(out, ref, atol=1e-3, rtol=1e-3), "Pallas kernel (f32 MXU) mismatch"

    # bf16-MXU-operand path (perf path on v5e/v6e/v7x); softmax/residual stay f32.
    out_bf16 = jax.block_until_ready(
        attn_only_block(x, pos_embed, w_q, w_k, w_v, w_o, mxu_dtype=jnp.bfloat16))
    assert out_bf16.shape == ref.shape and out_bf16.dtype == ref.dtype
    assert jnp.allclose(out_bf16, ref, atol=3e-2, rtol=3e-2), "Pallas kernel (bf16 MXU) mismatch"

    print("KERNEL_OK")
</pallas_src>

<mosaic_0001>
module attributes {stable_mosaic.version = 11 : i64} {
  func.func @attn_only_block_kernel(%arg0: i32, %arg1: memref<1x8x32xf32, #tpu.memory_space<vmem>>, %arg2: memref<1x8x32xf32, #tpu.memory_space<vmem>>, %arg3: memref<4x32x8xf32, #tpu.memory_space<vmem>>, %arg4: memref<4x32x8xf32, #tpu.memory_space<vmem>>, %arg5: memref<4x32x8xf32, #tpu.memory_space<vmem>>, %arg6: memref<32x32xf32, #tpu.memory_space<vmem>>, %arg7: memref<1x8x32xf32, #tpu.memory_space<vmem>>, %arg8: memref<8x32xf32, #tpu.memory_space<vmem>>) attributes {dimension_semantics = [#tpu.dimension_semantics<parallel>], iteration_bounds = array<i64: 2>, scalar_prefetch = 0 : i64, scratch_operands = 1 : i64, tpu.core_type = #tpu.core_type<tc>, window_params = [{transform_indices = @transform_0, window_bounds = array<i64: 1, 8, 32>}, {transform_indices = @transform_1, window_bounds = array<i64: 1, 8, 32>}, {pipeline_mode = #tpu.pipeline_mode<synchronous>, transform_indices = @transform_2, window_bounds = array<i64: 4, 32, 8>}, {pipeline_mode = #tpu.pipeline_mode<synchronous>, transform_indices = @transform_3, window_bounds = array<i64: 4, 32, 8>}, {pipeline_mode = #tpu.pipeline_mode<synchronous>, transform_indices = @transform_4, window_bounds = array<i64: 4, 32, 8>}, {pipeline_mode = #tpu.pipeline_mode<synchronous>, transform_indices = @transform_5, window_bounds = array<i64: 32, 32>}, {transform_indices = @transform_6, window_bounds = array<i64: 1, 8, 32>}]} {
    %c0 = arith.constant 0 : index
    %c0_0 = arith.constant 0 : index
    %c0_1 = arith.constant 0 : index
    %0 = vector.load %arg1[%c0, %c0_0, %c0_1] : memref<1x8x32xf32, #tpu.memory_space<vmem>>, vector<1x8x32xf32>
    %1 = vector.shape_cast %0 : vector<1x8x32xf32> to vector<8x32xf32>
    %c0_2 = arith.constant 0 : index
    %c0_3 = arith.constant 0 : index
    %c0_4 = arith.constant 0 : index
    %2 = vector.load %arg2[%c0_2, %c0_3, %c0_4] : memref<1x8x32xf32, #tpu.memory_space<vmem>>, vector<1x8x32xf32>
    %3 = vector.shape_cast %2 : vector<1x8x32xf32> to vector<8x32xf32>
    %4 = arith.addf %1, %3 : vector<8x32xf32>
    %5 = vector.shape_cast %1 : vector<8x32xf32> to vector<1x8x32xf32>
    %6 = vector.shape_cast %5 : vector<1x8x32xf32> to vector<1x8x32xf32>
    %7 = vector.broadcast %6 : vector<1x8x32xf32> to vector<4x8x32xf32>
    %8 = vector.shape_cast %4 : vector<8x32xf32> to vector<1x8x32xf32>
    %9 = vector.shape_cast %8 : vector<1x8x32xf32> to vector<1x8x32xf32>
    %10 = vector.broadcast %9 : vector<1x8x32xf32> to vector<4x8x32xf32>
    %c0_5 = arith.constant 0 : index
    %c0_6 = arith.constant 0 : index
    %c0_7 = arith.constant 0 : index
    %11 = vector.load %arg3[%c0_5, %c0_6, %c0_7] : memref<4x32x8xf32, #tpu.memory_space<vmem>>, vector<4x32x8xf32>
    "tpu.trace_start"() <{level = 10 : i32, message = "hpd,hde->hpe"}> : () -> ()
    %cst = arith.constant dense<0.000000e+00> : vector<4x8x8xf32>
    %12 = tpu.matmul %10, %11, %cst {dimension_numbers = #tpu.dot_dimension_numbers<[2], [1], [1], [2], [0, 0, 0, 1, 1, 2], [0], [0]>} : vector<4x8x32xf32>, vector<4x32x8xf32>, vector<4x8x8xf32> -> vector<4x8x8xf32>
    "tpu.trace_stop"() : () -> ()
    %c0_8 = arith.constant 0 : index
    %c0_9 = arith.constant 0 : index
    %c0_10 = arith.constant 0 : index
    %13 = vector.load %arg4[%c0_8, %c0_9, %c0_10] : memref<4x32x8xf32, #tpu.memory_space<vmem>>, vector<4x32x8xf32>
    "tpu.trace_start"() <{level = 10 : i32, message = "hpd,hde->hpe"}> : () -> ()
    %cst_11 = arith.constant dense<0.000000e+00> : vector<4x8x8xf32>
    %14 = tpu.matmul %10, %13, %cst_11 {dimension_numbers = #tpu.dot_dimension_numbers<[2], [1], [1], [2], [0, 0, 0, 1, 1, 2], [0], [0]>} : vector<4x8x32xf32>, vector<4x32x8xf32>, vector<4x8x8xf32> -> vector<4x8x8xf32>
    "tpu.trace_stop"() : () -> ()
    %c0_12 = arith.constant 0 : index
    %c0_13 = arith.constant 0 : index
    %c0_14 = arith.constant 0 : index
    %15 = vector.load %arg5[%c0_12, %c0_13, %c0_14] : memref<4x32x8xf32, #tpu.memory_space<vmem>>, vector<4x32x8xf32>
    "tpu.trace_start"() <{level = 10 : i32, message = "hpd,hde->hpe"}> : () -> ()
    %cst_15 = arith.constant dense<0.000000e+00> : vector<4x8x8xf32>
    %16 = tpu.matmul %7, %15, %cst_15 {dimension_numbers = #tpu.dot_dimension_numbers<[2], [1], [1], [2], [0, 0, 0, 1, 1, 2], [0], [0]>} : vector<4x8x32xf32>, vector<4x32x8xf32>, vector<4x8x8xf32> -> vector<4x8x8xf32>
    "tpu.trace_stop"() : () -> ()
    "tpu.trace_start"() <{level = 10 : i32, message = "hpe,hqe->hpq"}> : () -> ()
    %cst_16 = arith.constant dense<0.000000e+00> : vector<4x8x8xf32>
    %17 = tpu.matmul %12, %14, %cst_16 {dimension_numbers = #tpu.dot_dimension_numbers<[2], [2], [1], [1], [0, 0, 0, 1, 1, 1], [0], [0]>} : vector<4x8x8xf32>, vector<4x8x8xf32>, vector<4x8x8xf32> -> vector<4x8x8xf32>
    "tpu.trace_stop"() : () -> ()
    %18 = tpu.iota {dimensions = array<i32: 0>} : vector<8x8xi32>
    %19 = tpu.iota {dimensions = array<i32: 1>} : vector<8x8xi32>
    %20 = arith.cmpi sle, %19, %18 : vector<8x8xi32>
    %cst_17 = arith.constant -1.000000e+05 : f32
    %21 = vector.shape_cast %20 : vector<8x8xi1> to vector<1x8x8xi1>
    %22 = vector.broadcast %21 : vector<1x8x8xi1> to vector<4x8x8xi1>
    %23 = vector.broadcast %cst_17 : f32 to vector<4x8x8xf32>
    %24 = arith.select %22, %17, %23 : vector<4x8x8xi1>, vector<4x8x8xf32>
    %cst_18 = arith.constant dense<0xFF800000> : vector<4x8xf32>
    %25 = vector.multi_reduction <maximumf>, %24, %cst_18 [2] : vector<4x8x8xf32> to vector<4x8xf32>
    %26 = vector.shape_cast %25 : vector<4x8xf32> to vector<4x8x1xf32>
    %27 = vector.broadcast %26 : vector<4x8x1xf32> to vector<4x8x8xf32>
    %28 = arith.subf %24, %27 : vector<4x8x8xf32>
    %29 = math.exp %28 : vector<4x8x8xf32>
    %cst_19 = arith.constant dense<0.000000e+00> : vector<4x8xf32>
    %30 = vector.multi_reduction <add>, %29, %cst_19 [2] : vector<4x8x8xf32> to vector<4x8xf32>
    %31 = vector.shape_cast %30 : vector<4x8xf32> to vector<4x8x1xf32>
    %32 = tpu.reciprocal %31 {approx = true} : vector<4x8x1xf32> -> vector<4x8x1xf32>
    %33 = vector.broadcast %32 : vector<4x8x1xf32> to vector<4x8x8xf32>
    %34 = arith.mulf %29, %33 : vector<4x8x8xf32>
    "tpu.trace_start"() <{level = 10 : i32, message = "hpq,hqe->hpe"}> : () -> ()
    %cst_20 = arith.constant dense<0.000000e+00> : vector<4x8x8xf32>
    %35 = tpu.matmul %34, %16, %cst_20 {dimension_numbers = #tpu.dot_dimension_numbers<[2], [1], [1], [2], [0, 0, 0, 1, 1, 2], [0], [0]>} : vector<4x8x8xf32>, vector<4x8x8xf32>, vector<4x8x8xf32> -> vector<4x8x8xf32>
    "tpu.trace_stop"() : () -> ()
    %36 = vector.extract_strided_slice %35 {offsets = [0, 0, 0], sizes = [1, 8, 8], strides = [1, 1, 1]} : vector<4x8x8xf32> to vector<1x8x8xf32>
    %37 = vector.shape_cast %36 : vector<1x8x8xf32> to vector<8x8xf32>
    %c0_21 = arith.constant 0 : index
    %c0_22 = arith.constant 0 : index
    %38 = vector.load %arg8[%c0_21, %c0_22] : memref<8x32xf32, #tpu.memory_space<vmem>>, vector<8x8xf32>
    tpu.vector_store %arg8[%c0_21, %c0_22], %37 {strides = array<i32>} : memref<8x32xf32, #tpu.memory_space<vmem>>, vector<8x8xf32>,
    %39 = vector.extract_strided_slice %35 {offsets = [1, 0, 0], sizes = [1, 8, 8], strides = [1, 1, 1]} : vector<4x8x8xf32> to vector<1x8x8xf32>
    %40 = vector.shape_cast %39 : vector<1x8x8xf32> to vector<8x8xf32>
    %c0_23 = arith.constant 0 : index
    %c8 = arith.constant 8 : index
    %41 = vector.load %arg8[%c0_23, %c8] : memref<8x32xf32, #tpu.memory_space<vmem>>, vector<8x8xf32>
    tpu.vector_store %arg8[%c0_23, %c8], %40 {strides = array<i32>} : memref<8x32xf32, #tpu.memory_space<vmem>>, vector<8x8xf32>,
    %42 = vector.extract_strided_slice %35 {offsets = [2, 0, 0], sizes = [1, 8, 8], strides = [1, 1, 1]} : vector<4x8x8xf32> to vector<1x8x8xf32>
    %43 = vector.shape_cast %42 : vector<1x8x8xf32> to vector<8x8xf32>
    %c0_24 = arith.constant 0 : index
    %c16 = arith.constant 16 : index
    %44 = vector.load %arg8[%c0_24, %c16] : memref<8x32xf32, #tpu.memory_space<vmem>>, vector<8x8xf32>
    tpu.vector_store %arg8[%c0_24, %c16], %43 {strides = array<i32>} : memref<8x32xf32, #tpu.memory_space<vmem>>, vector<8x8xf32>,
    %45 = vector.extract_strided_slice %35 {offsets = [3, 0, 0], sizes = [1, 8, 8], strides = [1, 1, 1]} : vector<4x8x8xf32> to vector<1x8x8xf32>
    %46 = vector.shape_cast %45 : vector<1x8x8xf32> to vector<8x8xf32>
    %c0_25 = arith.constant 0 : index
    %c24 = arith.constant 24 : index
    %47 = vector.load %arg8[%c0_25, %c24] : memref<8x32xf32, #tpu.memory_space<vmem>>, vector<8x8xf32>
    tpu.vector_store %arg8[%c0_25, %c24], %46 {strides = array<i32>} : memref<8x32xf32, #tpu.memory_space<vmem>>, vector<8x8xf32>,
    %c0_26 = arith.constant 0 : index
    %c0_27 = arith.constant 0 : index
    %48 = vector.load %arg8[%c0_26, %c0_27] : memref<8x32xf32, #tpu.memory_space<vmem>>, vector<8x32xf32>
    %c0_28 = arith.constant 0 : index
    %c0_29 = arith.constant 0 : index
    %49 = vector.load %arg6[%c0_28, %c0_29] : memref<32x32xf32, #tpu.memory_space<vmem>>, vector<32x32xf32>
    %cst_30 = arith.constant dense<0.000000e+00> : vector<8x32xf32>
    %50 = tpu.matmul %48, %49, %cst_30 {dimension_numbers = #tpu.dot_dimension_numbers<[1], [0], [0], [1], [0, 0, 1, 1], [], []>} : vector<8x32xf32>, vector<32x32xf32>, vector<8x32xf32> -> vector<8x32xf32>
    %51 = arith.addf %1, %50 : vector<8x32xf32>
    %c0_31 = arith.constant 0 : index
    %c0_32 = arith.constant 0 : index
    %c0_33 = arith.constant 0 : index
    %52 = vector.load %arg7[%c0_31, %c0_32, %c0_33] : memref<1x8x32xf32, #tpu.memory_space<vmem>>, vector<1x8x32xf32>
    %53 = vector.shape_cast %52 : vector<1x8x32xf32> to vector<8x32xf32>
    %54 = vector.shape_cast %51 : vector<8x32xf32> to vector<1x8x32xf32>
    tpu.vector_store %arg7[%c0_31, %c0_32, %c0_33], %54 {strides = array<i32>} : memref<1x8x32xf32, #tpu.memory_space<vmem>>, vector<1x8x32xf32>,
    return
  }
  func.func @transform_0(%arg0: i32) -> (i32, i32, i32) {
    %c0_i32 = arith.constant 0 : i32
    %c0_i32_0 = arith.constant 0 : i32
    %c0_i32_1 = arith.constant 0 : i32
    return %arg0, %c0_i32, %c0_i32_0 : i32, i32, i32
  }
  func.func @transform_1(%arg0: i32) -> (i32, i32, i32) {
    %c0_i32 = arith.constant 0 : i32
    %c0_i32_0 = arith.constant 0 : i32
    %c0_i32_1 = arith.constant 0 : i32
    return %arg0, %c0_i32, %c0_i32_0 : i32, i32, i32
  }
  func.func @transform_2(%arg0: i32) -> (i32, i32, i32) {
    %c0_i32 = arith.constant 0 : i32
    %c0_i32_0 = arith.constant 0 : i32
    %c0_i32_1 = arith.constant 0 : i32
    %c0_i32_2 = arith.constant 0 : i32
    return %c0_i32, %c0_i32_0, %c0_i32_1 : i32, i32, i32
  }
  func.func @transform_3(%arg0: i32) -> (i32, i32, i32) {
    %c0_i32 = arith.constant 0 : i32
    %c0_i32_0 = arith.constant 0 : i32
    %c0_i32_1 = arith.constant 0 : i32
    %c0_i32_2 = arith.constant 0 : i32
    return %c0_i32, %c0_i32_0, %c0_i32_1 : i32, i32, i32
  }
  func.func @transform_4(%arg0: i32) -> (i32, i32, i32) {
    %c0_i32 = arith.constant 0 : i32
    %c0_i32_0 = arith.constant 0 : i32
    %c0_i32_1 = arith.constant 0 : i32
    %c0_i32_2 = arith.constant 0 : i32
    return %c0_i32, %c0_i32_0, %c0_i32_1 : i32, i32, i32
  }
  func.func @transform_5(%arg0: i32) -> (i32, i32) {
    %c0_i32 = arith.constant 0 : i32
    %c0_i32_0 = arith.constant 0 : i32
    %c0_i32_1 = arith.constant 0 : i32
    return %c0_i32, %c0_i32_0 : i32, i32
  }
  func.func @transform_6(%arg0: i32) -> (i32, i32, i32) {
    %c0_i32 = arith.constant 0 : i32
    %c0_i32_0 = arith.constant 0 : i32
    %c0_i32_1 = arith.constant 0 : i32
    return %arg0, %c0_i32, %c0_i32_0 : i32, i32, i32
  }
}

</mosaic_0001>

<llo_original>
// kernel: attn_only_block.1
$region0: #{attn_only_block.1}
  #allocation0 [shape = 'u32[]', space=smem, size = 0x4, offset = 0x4, fixed_abs, tag = 'smem constant byte address 0x4 - core index']
  #allocation1 [shape = 'u32[144,128]{1,0:T(1,128)}', space=vmem, size = 0x12000, scoped, tag = 'internal scratch']
  #allocation2 [shape = 'f32[8,32]{1,0:T(8,128)}', space=vmem, size = 0x1000, scoped, tag = 'scratch operand']
  %s0 = inlined_call_operand.hbm [shape: f32[2,8,32], index: 0, kind: input, shape index: {}, may-alias: {0,6}]
  %s1 = inlined_call_operand.vmem [shape: f32[2,8,32], index: 1, kind: input, shape index: {}]
  %s2 = inlined_call_operand.vmem [shape: f32[4,32,8], index: 2, kind: input, shape index: {}]
  %s3 = inlined_call_operand.vmem [shape: f32[4,32,8], index: 3, kind: input, shape index: {}]
  %s4 = inlined_call_operand.vmem [shape: f32[4,32,8], index: 4, kind: input, shape index: {}]
  %s5 = inlined_call_operand.vmem [shape: f32[32,32], index: 5, kind: input, shape index: {}]
  %s6 = inlined_call_operand.hbm [shape: f32[2,8,32], index: 6, kind: output, shape index: {}, may-alias: {0,6}]
  %s7 = sld [smem:[#allocation0]]
  $region61: #{attn_only_block.1} parent=0
    _
  %s9 = ssub.s32 1, %s7
  %s10 = scalar_select 0, %s9, %s7
  $region1: #{attn_only_block.1} parent=0
    #allocation3 [shape = 'u8[8192]{0}', space=vmem, size = 0x2000, scoped, tag = 'input window, operand 0']
    #allocation4 [shape = 's32[2]{0}', space=sflag, size = 0x8, scoped, tag = 'scoped memory for attn_only_block.1']
    #allocation5 [shape = 's32[2]{0}', space=sflag, size = 0x8, scoped, tag = 'scoped memory for attn_only_block.1']
    #allocation6 [shape = 'u8[8192]{0}', space=vmem, size = 0x2000, scoped, tag = 'output window, operand 0']
    %11 = vsyncpa [#allocation4], 0
    %s12 = scalar_lea.sflag [#allocation4], 1
    %13 = vsyncpa %s12, 0
    %14 = vsyncpa [#allocation5], 0
    %s15 = scalar_lea.sflag [#allocation5], 1
    %16 = vsyncpa %s15, 0
    loop: start=0, step=1, limit=4
    $region2: #{attn_only_block.1} parent=1 // loop_pre_header
      _
    $region3: #{attn_only_block.1} parent=1 // loop_header
      %s18 = sphi 0, %s22
      %p19 = scmp.ge.s32.totalorder %s18, 4
      %s28 = sphi 0, %s30
      %s31 = sphi 0, %s28
      %s32 = sphi 0, %s31
      %s48 = sphi 0, %s32
      %s54 = sphi 0, %s56
      %s57 = sphi 0, %s54
      %s58 = sphi 0, %s57
      %s74 = sphi 0, %s58
      %s78 = sphi 0, %s78
      %s80 = sphi 0, %s78
      %s81 = sphi 0, %s80
      %s95 = sphi 0, %s81
      %s99 = sphi 0, %s99
      %s101 = sphi 0, %s99
      %s102 = sphi 0, %s101
      %s116 = sphi 0, %s102
      %s120 = sphi 0, %s120
      %s122 = sphi 0, %s120
      %s123 = sphi 0, %s122
      %s137 = sphi 0, %s123
      %s141 = sphi 0, %s141
      %s143 = sphi 0, %s141
      %s144 = sphi 0, %s143
      %s158 = sphi 0, %s144
      %s164 = sphi 0, %s166
      %s167 = sphi 0, %s164
      %s168 = sphi 0, %s167
      %s184 = sphi 0, %s168
    $region4: #{attn_only_block.1} parent=1 // loop_header_branch
      %21 = sbr.rel (%p19) target = $region8
    $region5: #{attn_only_block.1} parent=1 // loop_body
      %s23 = ssub.s32 %s18, 1
      %s24 = ssub.s32 %s18, 2
      %s25 = sadd.s32 %s18, 1
      %s26 = ssub.s32 %s18, %s25
      %p27 = scmp.eq.s32.totalorder %s26, 0
      %s29 = sadd.s32 %s28, 1
      %s30 = scalar_select %p27, %s28, %s29
      %p33 = pneg %p27
      %p34 = scmp.eq.s32.totalorder %s18, 1
      %p35 = por %p33, %p34
      %p36 = scmp.ne.s32.totalorder %s28, %s31
      %p37 = scmp.eq.s32.totalorder %s18, 0
      %p38 = por %p36, %p37
      %p39 = scmp.ne.s32.totalorder %s28, %s31
      %p40 = scmp.eq.s32.totalorder %s23, 1
      %p41 = por %p39, %p40
      %p42 = scmp.ne.s32.totalorder %s31, %s32
      %p43 = scmp.eq.s32.totalorder %s23, 0
      %p44 = por %p42, %p43
      %p45 = scmp.ne.s32.totalorder %s31, %s32
      %p46 = scmp.eq.s32.totalorder %s24, 1
      %p47 = por %p45, %p46
      %p49 = scmp.ne.s32.totalorder %s32, %s48
      %p50 = scmp.eq.s32.totalorder %s24, 0
      %p51 = por %p49, %p50
      %s52 = ssub.s32 %s18, %s25
      %p53 = scmp.eq.s32.totalorder %s52, 0
      %s55 = sadd.s32 %s54, 1
      %s56 = scalar_select %p53, %s54, %s55
      %p59 = pneg %p53
      %p60 = scmp.eq.s32.totalorder %s18, 1
      %p61 = por %p59, %p60
      %p62 = scmp.ne.s32.totalorder %s54, %s57
      %p63 = scmp.eq.s32.totalorder %s18, 0
      %p64 = por %p62, %p63
      %p65 = scmp.ne.s32.totalorder %s54, %s57
      %p66 = scmp.eq.s32.totalorder %s23, 1
      %p67 = por %p65, %p66
      %p68 = scmp.ne.s32.totalorder %s57, %s58
      %p69 = scmp.eq.s32.totalorder %s23, 0
      %p70 = por %p68, %p69
      %p71 = scmp.ne.s32.totalorder %s57, %s58
      %p72 = scmp.eq.s32.totalorder %s24, 1
      %p73 = por %p71, %p72
      %p75 = scmp.ne.s32.totalorder %s58, %s74
      %p76 = scmp.eq.s32.totalorder %s24, 0
      %p77 = por %p75, %p76
      %s79 = sadd.s32 %s78, 1
      %p82 = scmp.eq.s32.totalorder %s18, 1
      %p83 = scmp.ne.s32.totalorder %s78, %s80
      %p84 = scmp.eq.s32.totalorder %s18, 0
      %p85 = por %p83, %p84
      %p86 = scmp.ne.s32.totalorder %s78, %s80
      %p87 = scmp.eq.s32.totalorder %s23, 1
      %p88 = por %p86, %p87
      %p89 = scmp.ne.s32.totalorder %s80, %s81
      %p90 = scmp.eq.s32.totalorder %s23, 0
      %p91 = por %p89, %p90
      %p92 = scmp.ne.s32.totalorder %s80, %s81
      %p93 = scmp.eq.s32.totalorder %s24, 1
      %p94 = por %p92, %p93
      %p96 = scmp.ne.s32.totalorder %s81, %s95
      %p97 = scmp.eq.s32.totalorder %s24, 0
      %p98 = por %p96, %p97
      %s100 = sadd.s32 %s99, 1
      %p103 = scmp.eq.s32.totalorder %s18, 1
      %p104 = scmp.ne.s32.totalorder %s99, %s101
      %p105 = scmp.eq.s32.totalorder %s18, 0
      %p106 = por %p104, %p105
      %p107 = scmp.ne.s32.totalorder %s99, %s101
      %p108 = scmp.eq.s32.totalorder %s23, 1
      %p109 = por %p107, %p108
      %p110 = scmp.ne.s32.totalorder %s101, %s102
      %p111 = scmp.eq.s32.totalorder %s23, 0
      %p112 = por %p110, %p111
      %p113 = scmp.ne.s32.totalorder %s101, %s102
      %p114 = scmp.eq.s32.totalorder %s24, 1
      %p115 = por %p113, %p114
      %p117 = scmp.ne.s32.totalorder %s102, %s116
      %p118 = scmp.eq.s32.totalorder %s24, 0
      %p119 = por %p117, %p118
      %s121 = sadd.s32 %s120, 1
      %p124 = scmp.eq.s32.totalorder %s18, 1
      %p125 = scmp.ne.s32.totalorder %s120, %s122
      %p126 = scmp.eq.s32.totalorder %s18, 0
      %p127 = por %p125, %p126
      %p128 = scmp.ne.s32.totalorder %s120, %s122
      %p129 = scmp.eq.s32.totalorder %s23, 1
      %p130 = por %p128, %p129
      %p131 = scmp.ne.s32.totalorder %s122, %s123
      %p132 = scmp.eq.s32.totalorder %s23, 0
      %p133 = por %p131, %p132
      %p134 = scmp.ne.s32.totalorder %s122, %s123
      %p135 = scmp.eq.s32.totalorder %s24, 1
      %p136 = por %p134, %p135
      %p138 = scmp.ne.s32.totalorder %s123, %s137
      %p139 = scmp.eq.s32.totalorder %s24, 0
      %p140 = por %p138, %p139
      %s142 = sadd.s32 %s141, 1
      %p145 = scmp.eq.s32.totalorder %s18, 1
      %p146 = scmp.ne.s32.totalorder %s141, %s143
      %p147 = scmp.eq.s32.totalorder %s18, 0
      %p148 = por %p146, %p147
      %p149 = scmp.ne.s32.totalorder %s141, %s143
      %p150 = scmp.eq.s32.totalorder %s23, 1
      %p151 = por %p149, %p150
      %p152 = scmp.ne.s32.totalorder %s143, %s144
      %p153 = scmp.eq.s32.totalorder %s23, 0
      %p154 = por %p152, %p153
      %p155 = scmp.ne.s32.totalorder %s143, %s144
      %p156 = scmp.eq.s32.totalorder %s24, 1
      %p157 = por %p155, %p156
      %p159 = scmp.ne.s32.totalorder %s144, %s158
      %p160 = scmp.eq.s32.totalorder %s24, 0
      %p161 = por %p159, %p160
      %s162 = ssub.s32 %s18, %s25
      %p163 = scmp.eq.s32.totalorder %s162, 0
      %s165 = sadd.s32 %s164, 1
      %s166 = scalar_select %p163, %s164, %s165
      %p169 = pneg %p163
      %p170 = scmp.eq.s32.totalorder %s18, 1
      %p171 = por %p169, %p170
      %p172 = scmp.ne.s32.totalorder %s164, %s167
      %p173 = scmp.eq.s32.totalorder %s18, 0
      %p174 = por %p172, %p173
      %p175 = scmp.ne.s32.totalorder %s164, %s167
      %p176 = scmp.eq.s32.totalorder %s23, 1
      %p177 = por %p175, %p176
      %p178 = scmp.ne.s32.totalorder %s167, %s168
      %p179 = scmp.eq.s32.totalorder %s23, 0
      %p180 = por %p178, %p179
      %p181 = scmp.ne.s32.totalorder %s167, %s168
      %p182 = scmp.eq.s32.totalorder %s24, 1
      %p183 = por %p181, %p182
      %p185 = scmp.ne.s32.totalorder %s168, %s184
      %p186 = scmp.eq.s32.totalorder %s24, 0
      %p187 = por %p185, %p186
      %p188 = scmp.le.s32.totalorder 1, %s18
      %p189 = scmp.lt.s32.totalorder %s18, 3
      %p190 = pnand %p188, %p189
      %p191 = pneg %p190
      // Predicated region
      $region9: #{attn_only_block.1} parent=5 // pred_check
        _
      $region10: #{attn_only_block.1} parent=5 // pred_check_branch
        %193 = sbr.rel (%p190) target = $region12
      $region11: #{attn_only_block.1} parent=5 // pred_region
        %s194 = ssub.s32 %s18, 1
        // Predicated region
        $region13: #{attn_only_block.1} parent=11 // pred_check
          %p195 = pneg %p91
        $region14: #{attn_only_block.1} parent=11 // pred_check_branch
          %197 = sbr.rel (%p195) target = $region16
        $region15: #{attn_only_block.1} parent=11 // pred_region
          _
        $region16: #{attn_only_block.1} parent=11 // pred_fallthru
          _
        // Predicated region
        $region17: #{attn_only_block.1} parent=11 // pred_check
          %p198 = pneg %p112
        $region18: #{attn_only_block.1} parent=11 // pred_check_branch
          %200 = sbr.rel (%p198) target = $region20
        $region19: #{attn_only_block.1} parent=11 // pred_region
          _
        $region20: #{attn_only_block.1} parent=11 // pred_fallthru
          _
        // Predicated region
        $region21: #{attn_only_block.1} parent=11 // pred_check
          %p201 = pneg %p133
        $region22: #{attn_only_block.1} parent=11 // pred_check_branch
          %203 = sbr.rel (%p201) target = $region24
        $region23: #{attn_only_block.1} parent=11 // pred_region
          _
        $region24: #{attn_only_block.1} parent=11 // pred_fallthru
          _
        // Predicated region
        $region25: #{attn_only_block.1} parent=11 // pred_check
          %p204 = pneg %p154
        $region26: #{attn_only_block.1} parent=11 // pred_check_branch
          %206 = sbr.rel (%p204) target = $region28
        $region27: #{attn_only_block.1} parent=11 // pred_region
          _
        $region28: #{attn_only_block.1} parent=11 // pred_fallthru
          _
      $region12: #{attn_only_block.1} parent=5 // pred_fallthru
        _
      %p207 = scmp.lt.s32.totalorder %s18, 2
      // Predicated region
      $region29: #{attn_only_block.1} parent=5 // pred_check
        %p208 = pneg %p207
      $region30: #{attn_only_block.1} parent=5 // pred_check_branch
        %210 = sbr.rel (%p208) target = $region32
      $region31: #{attn_only_block.1} parent=5 // pred_region
        // Predicated region
        $region33: #{attn_only_block.1} parent=31 // pred_check
          %p211 = pneg %p38
        $region34: #{attn_only_block.1} parent=31 // pred_check_branch
          %213 = sbr.rel (%p211) target = $region36
        $region35: #{attn_only_block.1} parent=31 // pred_region
          %s214 = sand.u32 %s28, 1
          %s215 = scalar_lea.sflag [#allocation4], %s214
          %s216 = sand.u32 %s28, 1
          %s217 = smul.addr %s216, 8
          %s218 = scalar_lea.vmem [#allocation3], %s217
          %s220 = ssub.s32 128, 128
          %221 = vsyncadd %s215, %s220
          %s222 = smul.addr %s18, 128
          %s223 = scalar_lea.hbm %s0, %s222
          %s225 = sshll.u32 %s218, 4
          %s226 = int_to_ptr.vmem [resolvable:$true] %s225
          %228 = dma.hbm_to_vmem [thread:$0]  %s223, 128, %s226, %s215
        $region36: #{attn_only_block.1} parent=31 // pred_fallthru
          _
        // Predicated region
        $region37: #{attn_only_block.1} parent=31 // pred_check
          %p229 = pneg %p64
        $region38: #{attn_only_block.1} parent=31 // pred_check_branch
          %231 = sbr.rel (%p229) target = $region40
        $region39: #{attn_only_block.1} parent=31 // pred_region
          %p232 = scmp.lt.s32.totalorder %s18, 1
          %s233 = scalar_select %p232, %s18, 1
          %s234 = smul.addr %s233, 8
          %s235 = scalar_lea.vmem %s1, %s234
        $region40: #{attn_only_block.1} parent=31 // pred_fallthru
          _
      $region32: #{attn_only_block.1} parent=5 // pred_fallthru
        _
      %p236 = scmp.le.s32.totalorder 1, %s18
      %p237 = scmp.lt.s32.totalorder %s18, 3
      %p238 = pnand %p236, %p237
      %p239 = pneg %p238
      // Predicated region
      $region41: #{attn_only_block.1} parent=5 // pred_check
        _
      $region42: #{attn_only_block.1} parent=5 // pred_check_branch
        %241 = sbr.rel (%p238) target = $region44
      $region43: #{attn_only_block.1} parent=5 // pred_region
        %s242 = ssub.s32 %s18, 1
        %s243 = sand.u32 %s31, 1
        %s244 = scalar_lea.sflag [#allocation4], %s243
        %s245 = sand.u32 %s31, 1
        %s246 = smul.addr %s245, 8
        %s247 = scalar_lea.vmem [#allocation3], %s246
        // Predicated region
        $region45: #{attn_only_block.1} parent=43 // pred_check
          %p248 = pneg %p44
        $region46: #{attn_only_block.1} parent=43 // pred_check_branch
          %250 = sbr.rel (%p248) target = $region48
        $region47: #{attn_only_block.1} parent=43 // pred_region
          %251 = dma.done %s244, 128
        $region48: #{attn_only_block.1} parent=43 // pred_fallthru
          _
        %s252 = sand.u32 %s31, 1
        %s253 = scalar_lea.sflag [#allocation4], %s252
        %s254 = sand.u32 %s31, 1
        %s255 = smul.addr %s254, 8
        %s256 = scalar_lea.vmem [#allocation3], %s255
        %p257 = pneg %p44
        %p258 = pneg %p41
        %p259 = scmp.lt.s32.totalorder %s23, 1
        %s260 = scalar_select %p259, %s23, 1
        %s261 = smul.addr %s260, 8
        %s262 = scalar_lea.vmem %s1, %s261
        %p263 = pneg %p70
        %p264 = pneg %p67
        %p265 = pneg %p91
        %p266 = pneg %p88
        %p267 = pneg %p112
        %p268 = pneg %p109
        %p269 = pneg %p133
        %p270 = pneg %p130
        %p271 = pneg %p154
        %p272 = pneg %p151
        %p273 = pneg %p180
        %p274 = pneg %p177
        %s275 = sand.u32 %s167, 1
        %s276 = scalar_lea.sflag [#allocation5], %s275
        %s277 = sand.u32 %s167, 1
        %s278 = smul.addr %s277, 8
        %s279 = scalar_lea.vmem [#allocation6], %s278
        %p280 = scmp.lt.s32.totalorder %s23, 1
        %s281 = scalar_select %p280, %s23, 1
        %s282 = smul.addr %s281, 8
        %s283 = scalar_lea.vmem %s1, %s282
        %v284 = vld [vmem:[%s247] sm:$0xff]
        %v285 = vld [vmem:[%s283] sm:$0xff]
        %v286 = vadd.f32 %v284, %v285
        %v287 = vld [vmem:[%s2] sm:$0xff]
        %v288 = vld [vmem:[%s2 + $0x8] sm:$0xff]
        %v289 = vld [vmem:[%s2 + $0x10] sm:$0xff]
        %v290 = vld [vmem:[%s2 + $0x18] sm:$0xff]
        %v291 = vld [vmem:[%s2 + $0x20] sm:$0xff]
        %v292 = vld [vmem:[%s2 + $0x28] sm:$0xff]
        %v293 = vld [vmem:[%s2 + $0x30] sm:$0xff]
        %v294 = vld [vmem:[%s2 + $0x38] sm:$0xff]
        %v295 = vld [vmem:[%s2 + $0x40] sm:$0xff]
        %v296 = vld [vmem:[%s2 + $0x48] sm:$0xff]
        %v297 = vld [vmem:[%s2 + $0x50] sm:$0xff]
        %v298 = vld [vmem:[%s2 + $0x58] sm:$0xff]
        %v299 = vld [vmem:[%s2 + $0x60] sm:$0xff]
        %v300 = vld [vmem:[%s2 + $0x68] sm:$0xff]
        %v301 = vld [vmem:[%s2 + $0x70] sm:$0xff]
        %v302 = vld [vmem:[%s2 + $0x78] sm:$0xff]
        %vm303 = vcmask 261120
        %v305 = vsel %vm303, %v286, 0
        %307 = vmatprep.subr.mxu0 0.0
        %308 = vmatpush1.msra.mxu0 0.0
        %309 = vmatprep.subr.mxu0 0.0
        %310 = vmatpush1.msra.mxu0 0.0
        %311 = vmatprep.subr.mxu0 0.0
        %312 = vmatpush1.msra.mxu0 0.0
        %313 = vmatprep.subr.mxu0 0.0
        %314 = vmatpush1.msra.mxu0 0.0
        %315 = vmatprep.subr.mxu0 0.0
        %316 = vmatpush1.msra.mxu0 0.0
        %317 = vmatprep.subr.mxu0 0.0
        %318 = vmatpush1.msra.mxu0 0.0
        %319 = vmatprep.subr.mxu0 0.0
        %320 = vmatpush1.msra.mxu0 0.0
        %321 = vmatprep.subr.mxu0 0.0
        %322 = vmatpush1.msra.mxu0 0.0
        %323 = vmatprep.subr.mxu0 0.0
        %324 = vmatpush1.msra.mxu0 0.0
        %325 = vmatprep.subr.mxu0 0.0
        %326 = vmatpush1.msra.mxu0 0.0
        %327 = vmatprep.subr.mxu0 0.0
        %328 = vmatpush1.msra.mxu0 0.0
        %329 = vmatprep.subr.mxu0 0.0
        %330 = vmatpush1.msra.mxu0 0.0
        %331 = vmatprep.subr.mxu0 0.0
        %332 = vmatpush1.msra.mxu0 %v290
        %333 = vmatprep.subr.mxu0 0.0
        %334 = vmatpush1.msra.mxu0 %v289
        %335 = vmatprep.subr.mxu0 0.0
        %336 = vmatpush1.msra.mxu0 %v288
        %337 = vmatprep.subr.mxu0 0.0
        %338 = vmatpush1.msra.mxu0 %v287
        %339 = vmatprep.subr.mxu0 0.0
        %340 = vmatpush2.msra.mxu0 0.0
        %341 = vmatprep.subr.mxu0 0.0
        %342 = vmatpush2.msra.mxu0 0.0
        %343 = vmatprep.subr.mxu0 0.0
        %344 = vmatpush2.msra.mxu0 0.0
        %345 = vmatprep.subr.mxu0 0.0
        %346 = vmatpush2.msra.mxu0 0.0
        %347 = vmatprep.subr.mxu0 0.0
        %348 = vmatpush2.msra.mxu0 0.0
        %349 = vmatprep.subr.mxu0 0.0
        %350 = vmatpush2.msra.mxu0 0.0
        %351 = vmatprep.subr.mxu0 0.0
        %352 = vmatpush2.msra.mxu0 0.0
        %353 = vmatprep.subr.mxu0 0.0
        %354 = vmatpush2.msra.mxu0 0.0
        %355 = vmatprep.subr.mxu0 0.0
        %356 = vmatpush2.msra.mxu0 0.0
        %357 = vmatprep.subr.mxu0 0.0
        %358 = vmatpush2.msra.mxu0 0.0
        %359 = vmatprep.subr.mxu0 0.0
        %360 = vmatpush2.msra.mxu0 0.0
        %361 = vmatprep.subr.mxu0 0.0
        %362 = vmatpush2.msra.mxu0 0.0
        %363 = vmatprep.subr.mxu0 0.0
        %364 = vmatpush2.msra.mxu0 0.0
        %365 = vmatprep.subr.mxu0 0.0
        %366 = vmatpush2.msra.mxu0 0.0
        %367 = vmatprep.subr.mxu0 0.0
        %368 = vmatpush2.msra.mxu0 0.0
        %369 = vmatprep.subr.mxu0 0.0
        %370 = vmatpush2.msra.mxu0 0.0
        %371 = vmatprep.mubr.f32.mxu0 0.0
        %372 = vmatmul.mubr.f32.gmra.mxu0 %v305
        %v373 = vpop.f32.mrf.mxu0
        %v374 = vadd.f32 0.0, %v373
        %v375 = vpop.f32.mrf.mxu0
        %376 = vdwg.mxu0
        %377 = vmatprep.subr.mxu0 0.0
        %378 = vmatpush1.msra.mxu0 0.0
        %379 = vmatprep.subr.mxu0 0.0
        %380 = vmatpush1.msra.mxu0 0.0
        %381 = vmatprep.subr.mxu0 0.0
        %382 = vmatpush1.msra.mxu0 0.0
        %383 = vmatprep.subr.mxu0 0.0
        %384 = vmatpush1.msra.mxu0 0.0
        %385 = vmatprep.subr.mxu0 0.0
        %386 = vmatpush1.msra.mxu0 0.0
        %387 = vmatprep.subr.mxu0 0.0
        %388 = vmatpush1.msra.mxu0 0.0
        %389 = vmatprep.subr.mxu0 0.0
        %390 = vmatpush1.msra.mxu0 0.0
        %391 = vmatprep.subr.mxu0 0.0
        %392 = vmatpush1.msra.mxu0 0.0
        %393 = vmatprep.subr.mxu0 0.0
        %394 = vmatpush1.msra.mxu0 0.0
        %395 = vmatprep.subr.mxu0 0.0
        %396 = vmatpush1.msra.mxu0 0.0
        %397 = vmatprep.subr.mxu0 0.0
        %398 = vmatpush1.msra.mxu0 0.0
        %399 = vmatprep.subr.mxu0 0.0
        %400 = vmatpush1.msra.mxu0 0.0
        %401 = vmatprep.subr.mxu0 0.0
        %402 = vmatpush1.msra.mxu0 %v294
        %403 = vmatprep.subr.mxu0 0.0
        %404 = vmatpush1.msra.mxu0 %v293
        %405 = vmatprep.subr.mxu0 0.0
        %406 = vmatpush1.msra.mxu0 %v292
        %407 = vmatprep.subr.mxu0 0.0
        %408 = vmatpush1.msra.mxu0 %v291
        %409 = vmatprep.subr.mxu0 0.0
        %410 = vmatpush2.msra.mxu0 0.0
        %411 = vmatprep.subr.mxu0 0.0
        %412 = vmatpush2.msra.mxu0 0.0
        %413 = vmatprep.subr.mxu0 0.0
        %414 = vmatpush2.msra.mxu0 0.0
        %415 = vmatprep.subr.mxu0 0.0
        %416 = vmatpush2.msra.mxu0 0.0
        %417 = vmatprep.subr.mxu0 0.0
        %418 = vmatpush2.msra.mxu0 0.0
        %419 = vmatprep.subr.mxu0 0.0
        %420 = vmatpush2.msra.mxu0 0.0
        %421 = vmatprep.subr.mxu0 0.0
        %422 = vmatpush2.msra.mxu0 0.0
        %423 = vmatprep.subr.mxu0 0.0
        %424 = vmatpush2.msra.mxu0 0.0
        %425 = vmatprep.subr.mxu0 0.0
        %426 = vmatpush2.msra.mxu0 0.0
        %427 = vmatprep.subr.mxu0 0.0
        %428 = vmatpush2.msra.mxu0 0.0
        %429 = vmatprep.subr.mxu0 0.0
        %430 = vmatpush2.msra.mxu0 0.0
        %431 = vmatprep.subr.mxu0 0.0
        %432 = vmatpush2.msra.mxu0 0.0
        %433 = vmatprep.subr.mxu0 0.0
        %434 = vmatpush2.msra.mxu0 0.0
        %435 = vmatprep.subr.mxu0 0.0
        %436 = vmatpush2.msra.mxu0 0.0
        %437 = vmatprep.subr.mxu0 0.0
        %438 = vmatpush2.msra.mxu0 0.0
        %439 = vmatprep.subr.mxu0 0.0
        %440 = vmatpush2.msra.mxu0 0.0
        %441 = vmatprep.mubr.f32.mxu0 0.0
        %442 = vmatmul.mubr.f32.gmra.mxu0 %v305
        %v443 = vpop.f32.mrf.mxu0
        %v444 = vadd.f32 0.0, %v443
        %v445 = vpop.f32.mrf.mxu0
        %446 = vdwg.mxu0
        %447 = vmatprep.subr.mxu0 0.0
        %448 = vmatpush1.msra.mxu0 0.0
        %449 = vmatprep.subr.mxu0 0.0
        %450 = vmatpush1.msra.mxu0 0.0
        %451 = vmatprep.subr.mxu0 0.0
        %452 = vmatpush1.msra.mxu0 0.0
        %453 = vmatprep.subr.mxu0 0.0
        %454 = vmatpush1.msra.mxu0 0.0
        %455 = vmatprep.subr.mxu0 0.0
        %456 = vmatpush1.msra.mxu0 0.0
        %457 = vmatprep.subr.mxu0 0.0
        %458 = vmatpush1.msra.mxu0 0.0
        %459 = vmatprep.subr.mxu0 0.0
        %460 = vmatpush1.msra.mxu0 0.0
        %461 = vmatprep.subr.mxu0 0.0
        %462 = vmatpush1.msra.mxu0 0.0
        %463 = vmatprep.subr.mxu0 0.0
        %464 = vmatpush1.msra.mxu0 0.0
        %465 = vmatprep.subr.mxu0 0.0
        %466 = vmatpush1.msra.mxu0 0.0
        %467 = vmatprep.subr.mxu0 0.0
        %468 = vmatpush1.msra.mxu0 0.0
        %469 = vmatprep.subr.mxu0 0.0
        %470 = vmatpush1.msra.mxu0 0.0
        %471 = vmatprep.subr.mxu0 0.0
        %472 = vmatpush1.msra.mxu0 %v298
        %473 = vmatprep.subr.mxu0 0.0
        %474 = vmatpush1.msra.mxu0 %v297
        %475 = vmatprep.subr.mxu0 0.0
        %476 = vmatpush1.msra.mxu0 %v296
        %477 = vmatprep.subr.mxu0 0.0
        %478 = vmatpush1.msra.mxu0 %v295
        %479 = vmatprep.subr.mxu0 0.0
        %480 = vmatpush2.msra.mxu0 0.0
        %481 = vmatprep.subr.mxu0 0.0
        %482 = vmatpush2.msra.mxu0 0.0
        %483 = vmatprep.subr.mxu0 0.0
        %484 = vmatpush2.msra.mxu0 0.0
        %485 = vmatprep.subr.mxu0 0.0
        %486 = vmatpush2.msra.mxu0 0.0
        %487 = vmatprep.subr.mxu0 0.0
        %488 = vmatpush2.msra.mxu0 0.0
        %489 = vmatprep.subr.mxu0 0.0
        %490 = vmatpush2.msra.mxu0 0.0
        %491 = vmatprep.subr.mxu0 0.0
        %492 = vmatpush2.msra.mxu0 0.0
        %493 = vmatprep.subr.mxu0 0.0
        %494 = vmatpush2.msra.mxu0 0.0
        %495 = vmatprep.subr.mxu0 0.0
        %496 = vmatpush2.msra.mxu0 0.0
        %497 = vmatprep.subr.mxu0 0.0
        %498 = vmatpush2.msra.mxu0 0.0
        %499 = vmatprep.subr.mxu0 0.0
        %500 = vmatpush2.msra.mxu0 0.0
        %501 = vmatprep.subr.mxu0 0.0
        %502 = vmatpush2.msra.mxu0 0.0
        %503 = vmatprep.subr.mxu0 0.0
        %504 = vmatpush2.msra.mxu0 0.0
        %505 = vmatprep.subr.mxu0 0.0
        %506 = vmatpush2.msra.mxu0 0.0
        %507 = vmatprep.subr.mxu0 0.0
        %508 = vmatpush2.msra.mxu0 0.0
        %509 = vmatprep.subr.mxu0 0.0
        %510 = vmatpush2.msra.mxu0 0.0
        %511 = vmatprep.mubr.f32.mxu0 0.0
        %512 = vmatmul.mubr.f32.gmra.mxu0 %v305
        %v513 = vpop.f32.mrf.mxu0
        %v514 = vadd.f32 0.0, %v513
        %v515 = vpop.f32.mrf.mxu0
        %516 = vdwg.mxu0
        %517 = vmatprep.subr.mxu0 0.0
        %518 = vmatpush1.msra.mxu0 0.0
        %519 = vmatprep.subr.mxu0 0.0
        %520 = vmatpush1.msra.mxu0 0.0
        %521 = vmatprep.subr.mxu0 0.0
        %522 = vmatpush1.msra.mxu0 0.0
        %523 = vmatprep.subr.mxu0 0.0
        %524 = vmatpush1.msra.mxu0 0.0
        %525 = vmatprep.subr.mxu0 0.0
        %526 = vmatpush1.msra.mxu0 0.0
        %527 = vmatprep.subr.mxu0 0.0
        %528 = vmatpush1.msra.mxu0 0.0
        %529 = vmatprep.subr.mxu0 0.0
        %530 = vmatpush1.msra.mxu0 0.0
        %531 = vmatprep.subr.mxu0 0.0
        %532 = vmatpush1.msra.mxu0 0.0
        %533 = vmatprep.subr.mxu0 0.0
        %534 = vmatpush1.msra.mxu0 0.0
        %535 = vmatprep.subr.mxu0 0.0
        %536 = vmatpush1.msra.mxu0 0.0
        %537 = vmatprep.subr.mxu0 0.0
        %538 = vmatpush1.msra.mxu0 0.0
        %539 = vmatprep.subr.mxu0 0.0
        %540 = vmatpush1.msra.mxu0 0.0
        %541 = vmatprep.subr.mxu0 0.0
        %542 = vmatpush1.msra.mxu0 %v302
        %543 = vmatprep.subr.mxu0 0.0
        %544 = vmatpush1.msra.mxu0 %v301
        %545 = vmatprep.subr.mxu0 0.0
        %546 = vmatpush1.msra.mxu0 %v300
        %547 = vmatprep.subr.mxu0 0.0
        %548 = vmatpush1.msra.mxu0 %v299
        %549 = vmatprep.subr.mxu0 0.0
        %550 = vmatpush2.msra.mxu0 0.0
        %551 = vmatprep.subr.mxu0 0.0
        %552 = vmatpush2.msra.mxu0 0.0
        %553 = vmatprep.subr.mxu0 0.0
        %554 = vmatpush2.msra.mxu0 0.0
        %555 = vmatprep.subr.mxu0 0.0
        %556 = vmatpush2.msra.mxu0 0.0
        %557 = vmatprep.subr.mxu0 0.0
        %558 = vmatpush2.msra.mxu0 0.0
        %559 = vmatprep.subr.mxu0 0.0
        %560 = vmatpush2.msra.mxu0 0.0
        %561 = vmatprep.subr.mxu0 0.0
        %562 = vmatpush2.msra.mxu0 0.0
        %563 = vmatprep.subr.mxu0 0.0
        %564 = vmatpush2.msra.mxu0 0.0
        %565 = vmatprep.subr.mxu0 0.0
        %566 = vmatpush2.msra.mxu0 0.0
        %567 = vmatprep.subr.mxu0 0.0
        %568 = vmatpush2.msra.mxu0 0.0
        %569 = vmatprep.subr.mxu0 0.0
        %570 = vmatpush2.msra.mxu0 0.0
        %571 = vmatprep.subr.mxu0 0.0
        %572 = vmatpush2.msra.mxu0 0.0
        %573 = vmatprep.subr.mxu0 0.0
        %574 = vmatpush2.msra.mxu0 0.0
        %575 = vmatprep.subr.mxu0 0.0
        %576 = vmatpush2.msra.mxu0 0.0
        %577 = vmatprep.subr.mxu0 0.0
        %578 = vmatpush2.msra.mxu0 0.0
        %579 = vmatprep.subr.mxu0 0.0
        %580 = vmatpush2.msra.mxu0 0.0
        %581 = vmatprep.mubr.f32.mxu0 0.0
        %582 = vmatmul.mubr.f32.gmra.mxu0 %v305
        %v583 = vpop.f32.mrf.mxu0
        %v584 = vadd.f32 0.0, %v583
        %v585 = vpop.f32.mrf.mxu0
        %586 = vdwg.mxu0
        %v587 = vld [vmem:[%s3] sm:$0xff]
        %v588 = vld [vmem:[%s3 + $0x8] sm:$0xff]
        %v589 = vld [vmem:[%s3 + $0x10] sm:$0xff]
        %v590 = vld [vmem:[%s3 + $0x18] sm:$0xff]
        %v591 = vld [vmem:[%s3 + $0x20] sm:$0xff]
        %v592 = vld [vmem:[%s3 + $0x28] sm:$0xff]
        %v593 = vld [vmem:[%s3 + $0x30] sm:$0xff]
        %v594 = vld [vmem:[%s3 + $0x38] sm:$0xff]
        %v595 = vld [vmem:[%s3 + $0x40] sm:$0xff]
        %v596 = vld [vmem:[%s3 + $0x48] sm:$0xff]
        %v597 = vld [vmem:[%s3 + $0x50] sm:$0xff]
        %v598 = vld [vmem:[%s3 + $0x58] sm:$0xff]
        %v599 = vld [vmem:[%s3 + $0x60] sm:$0xff]
        %v600 = vld [vmem:[%s3 + $0x68] sm:$0xff]
        %v601 = vld [vmem:[%s3 + $0x70] sm:$0xff]
        %v602 = vld [vmem:[%s3 + $0x78] sm:$0xff]
        %603 = vmatprep.subr.mxu0 0.0
        %604 = vmatpush1.msra.mxu0 0.0
        %605 = vmatprep.subr.mxu0 0.0
        %606 = vmatpush1.msra.mxu0 0.0
        %607 = vmatprep.subr.mxu0 0.0
        %608 = vmatpush1.msra.mxu0 0.0
        %609 = vmatprep.subr.mxu0 0.0
        %610 = vmatpush1.msra.mxu0 0.0
        %611 = vmatprep.subr.mxu0 0.0
        %612 = vmatpush1.msra.mxu0 0.0
        %613 = vmatprep.subr.mxu0 0.0
        %614 = vmatpush1.msra.mxu0 0.0
        %615 = vmatprep.subr.mxu0 0.0
        %616 = vmatpush1.msra.mxu0 0.0
        %617 = vmatprep.subr.mxu0 0.0
        %618 = vmatpush1.msra.mxu0 0.0
        %619 = vmatprep.subr.mxu0 0.0
        %620 = vmatpush1.msra.mxu0 0.0
        %621 = vmatprep.subr.mxu0 0.0
        %622 = vmatpush1.msra.mxu0 0.0
        %623 = vmatprep.subr.mxu0 0.0
        %624 = vmatpush1.msra.mxu0 0.0
        %625 = vmatprep.subr.mxu0 0.0
        %626 = vmatpush1.msra.mxu0 0.0
        %627 = vmatprep.subr.mxu0 0.0
        %628 = vmatpush1.msra.mxu0 %v590
        %629 = vmatprep.subr.mxu0 0.0
        %630 = vmatpush1.msra.mxu0 %v589
        %631 = vmatprep.subr.mxu0 0.0
        %632 = vmatpush1.msra.mxu0 %v588
        %633 = vmatprep.subr.mxu0 0.0
        %634 = vmatpush1.msra.mxu0 %v587
        %635 = vmatprep.subr.mxu0 0.0
        %636 = vmatpush2.msra.mxu0 0.0
        %637 = vmatprep.subr.mxu0 0.0
        %638 = vmatpush2.msra.mxu0 0.0
        %639 = vmatprep.subr.mxu0 0.0
        %640 = vmatpush2.msra.mxu0 0.0
        %641 = vmatprep.subr.mxu0 0.0
        %642 = vmatpush2.msra.mxu0 0.0
        %643 = vmatprep.subr.mxu0 0.0
        %644 = vmatpush2.msra.mxu0 0.0
        %645 = vmatprep.subr.mxu0 0.0
        %646 = vmatpush2.msra.mxu0 0.0
        %647 = vmatprep.subr.mxu0 0.0
        %648 = vmatpush2.msra.mxu0 0.0
        %649 = vmatprep.subr.mxu0 0.0
        %650 = vmatpush2.msra.mxu0 0.0
        %651 = vmatprep.subr.mxu0 0.0
        %652 = vmatpush2.msra.mxu0 0.0
        %653 = vmatprep.subr.mxu0 0.0
        %654 = vmatpush2.msra.mxu0 0.0
        %655 = vmatprep.subr.mxu0 0.0
        %656 = vmatpush2.msra.mxu0 0.0
        %657 = vmatprep.subr.mxu0 0.0
        %658 = vmatpush2.msra.mxu0 0.0
        %659 = vmatprep.subr.mxu0 0.0
        %660 = vmatpush2.msra.mxu0 0.0
        %661 = vmatprep.subr.mxu0 0.0
        %662 = vmatpush2.msra.mxu0 0.0
        %663 = vmatprep.subr.mxu0 0.0
        %664 = vmatpush2.msra.mxu0 0.0
        %665 = vmatprep.subr.mxu0 0.0
        %666 = vmatpush2.msra.mxu0 0.0
        %667 = vmatprep.mubr.f32.mxu0 0.0
        %668 = vmatmul.mubr.f32.gmra.mxu0 %v305
        %v669 = vpop.f32.mrf.mxu0
        %v670 = vadd.f32 0.0, %v669
        %v671 = vpop.f32.mrf.mxu0
        %672 = vdwg.mxu0
        %673 = vmatprep.subr.mxu0 0.0
        %674 = vmatpush1.msra.mxu0 0.0
        %675 = vmatprep.subr.mxu0 0.0
        %676 = vmatpush1.msra.mxu0 0.0
        %677 = vmatprep.subr.mxu0 0.0
        %678 = vmatpush1.msra.mxu0 0.0
        %679 = vmatprep.subr.mxu0 0.0
        %680 = vmatpush1.msra.mxu0 0.0
        %681 = vmatprep.subr.mxu0 0.0
        %682 = vmatpush1.msra.mxu0 0.0
        %683 = vmatprep.subr.mxu0 0.0
        %684 = vmatpush1.msra.mxu0 0.0
        %685 = vmatprep.subr.mxu0 0.0
        %686 = vmatpush1.msra.mxu0 0.0
        %687 = vmatprep.subr.mxu0 0.0
        %688 = vmatpush1.msra.mxu0 0.0
        %689 = vmatprep.subr.mxu0 0.0
        %690 = vmatpush1.msra.mxu0 0.0
        %691 = vmatprep.subr.mxu0 0.0
        %692 = vmatpush1.msra.mxu0 0.0
        %693 = vmatprep.subr.mxu0 0.0
        %694 = vmatpush1.msra.mxu0 0.0
        %695 = vmatprep.subr.mxu0 0.0
        %696 = vmatpush1.msra.mxu0 0.0
        %697 = vmatprep.subr.mxu0 0.0
        %698 = vmatpush1.msra.mxu0 %v594
        %699 = vmatprep.subr.mxu0 0.0
        %700 = vmatpush1.msra.mxu0 %v593
        %701 = vmatprep.subr.mxu0 0.0
        %702 = vmatpush1.msra.mxu0 %v592
        %703 = vmatprep.subr.mxu0 0.0
        %704 = vmatpush1.msra.mxu0 %v591
        %705 = vmatprep.subr.mxu0 0.0
        %706 = vmatpush2.msra.mxu0 0.0
        %707 = vmatprep.subr.mxu0 0.0
        %708 = vmatpush2.msra.mxu0 0.0
        %709 = vmatprep.subr.mxu0 0.0
        %710 = vmatpush2.msra.mxu0 0.0
        %711 = vmatprep.subr.mxu0 0.0
        %712 = vmatpush2.msra.mxu0 0.0
        %713 = vmatprep.subr.mxu0 0.0
        %714 = vmatpush2.msra.mxu0 0.0
        %715 = vmatprep.subr.mxu0 0.0
        %716 = vmatpush2.msra.mxu0 0.0
        %717 = vmatprep.subr.mxu0 0.0
        %718 = vmatpush2.msra.mxu0 0.0
        %719 = vmatprep.subr.mxu0 0.0
        %720 = vmatpush2.msra.mxu0 0.0
        %721 = vmatprep.subr.mxu0 0.0
        %722 = vmatpush2.msra.mxu0 0.0
        %723 = vmatprep.subr.mxu0 0.0
        %724 = vmatpush2.msra.mxu0 0.0
        %725 = vmatprep.subr.mxu0 0.0
        %726 = vmatpush2.msra.mxu0 0.0
        %727 = vmatprep.subr.mxu0 0.0
        %728 = vmatpush2.msra.mxu0 0.0
        %729 = vmatprep.subr.mxu0 0.0
        %730 = vmatpush2.msra.mxu0 0.0
        %731 = vmatprep.subr.mxu0 0.0
        %732 = vmatpush2.msra.mxu0 0.0
        %733 = vmatprep.subr.mxu0 0.0
        %734 = vmatpush2.msra.mxu0 0.0
        %735 = vmatprep.subr.mxu0 0.0
        %736 = vmatpush2.msra.mxu0 0.0
        %737 = vmatprep.mubr.f32.mxu0 0.0
        %738 = vmatmul.mubr.f32.gmra.mxu0 %v305
        %v739 = vpop.f32.mrf.mxu0
        %v740 = vadd.f32 0.0, %v739
        %v741 = vpop.f32.mrf.mxu0
        %742 = vdwg.mxu0
        %743 = vmatprep.subr.mxu0 0.0
        %744 = vmatpush1.msra.mxu0 0.0
        %745 = vmatprep.subr.mxu0 0.0
        %746 = vmatpush1.msra.mxu0 0.0
        %747 = vmatprep.subr.mxu0 0.0
        %748 = vmatpush1.msra.mxu0 0.0
        %749 = vmatprep.subr.mxu0 0.0
        %750 = vmatpush1.msra.mxu0 0.0
        %751 = vmatprep.subr.mxu0 0.0
        %752 = vmatpush1.msra.mxu0 0.0
        %753 = vmatprep.subr.mxu0 0.0
        %754 = vmatpush1.msra.mxu0 0.0
        %755 = vmatprep.subr.mxu0 0.0
        %756 = vmatpush1.msra.mxu0 0.0
        %757 = vmatprep.subr.mxu0 0.0
        %758 = vmatpush1.msra.mxu0 0.0
        %759 = vmatprep.subr.mxu0 0.0
        %760 = vmatpush1.msra.mxu0 0.0
        %761 = vmatprep.subr.mxu0 0.0
        %762 = vmatpush1.msra.mxu0 0.0
        %763 = vmatprep.subr.mxu0 0.0
        %764 = vmatpush1.msra.mxu0 0.0
        %765 = vmatprep.subr.mxu0 0.0
        %766 = vmatpush1.msra.mxu0 0.0
        %767 = vmatprep.subr.mxu0 0.0
        %768 = vmatpush1.msra.mxu0 %v598
        %769 = vmatprep.subr.mxu0 0.0
        %770 = vmatpush1.msra.mxu0 %v597
        %771 = vmatprep.subr.mxu0 0.0
        %772 = vmatpush1.msra.mxu0 %v596
        %773 = vmatprep.subr.mxu0 0.0
        %774 = vmatpush1.msra.mxu0 %v595
        %775 = vmatprep.subr.mxu0 0.0
        %776 = vmatpush2.msra.mxu0 0.0
        %777 = vmatprep.subr.mxu0 0.0
        %778 = vmatpush2.msra.mxu0 0.0
        %779 = vmatprep.subr.mxu0 0.0
        %780 = vmatpush2.msra.mxu0 0.0
        %781 = vmatprep.subr.mxu0 0.0
        %782 = vmatpush2.msra.mxu0 0.0
        %783 = vmatprep.subr.mxu0 0.0
        %784 = vmatpush2.msra.mxu0 0.0
        %785 = vmatprep.subr.mxu0 0.0
        %786 = vmatpush2.msra.mxu0 0.0
        %787 = vmatprep.subr.mxu0 0.0
        %788 = vmatpush2.msra.mxu0 0.0
        %789 = vmatprep.subr.mxu0 0.0
        %790 = vmatpush2.msra.mxu0 0.0
        %791 = vmatprep.subr.mxu0 0.0
        %792 = vmatpush2.msra.mxu0 0.0
        %793 = vmatprep.subr.mxu0 0.0
        %794 = vmatpush2.msra.mxu0 0.0
        %795 = vmatprep.subr.mxu0 0.0
        %796 = vmatpush2.msra.mxu0 0.0
        %797 = vmatprep.subr.mxu0 0.0
        %798 = vmatpush2.msra.mxu0 0.0
        %799 = vmatprep.subr.mxu0 0.0
        %800 = vmatpush2.msra.mxu0 0.0
        %801 = vmatprep.subr.mxu0 0.0
        %802 = vmatpush2.msra.mxu0 0.0
        %803 = vmatprep.subr.mxu0 0.0
        %804 = vmatpush2.msra.mxu0 0.0
        %805 = vmatprep.subr.mxu0 0.0
        %806 = vmatpush2.msra.mxu0 0.0
        %807 = vmatprep.mubr.f32.mxu0 0.0
        %808 = vmatmul.mubr.f32.gmra.mxu0 %v305
        %v809 = vpop.f32.mrf.mxu0
        %v810 = vadd.f32 0.0, %v809
        %v811 = vpop.f32.mrf.mxu0
        %812 = vdwg.mxu0
        %813 = vmatprep.subr.mxu0 0.0
        %814 = vmatpush1.msra.mxu0 0.0
        %815 = vmatprep.subr.mxu0 0.0
        %816 = vmatpush1.msra.mxu0 0.0
        %817 = vmatprep.subr.mxu0 0.0
        %818 = vmatpush1.msra.mxu0 0.0
        %819 = vmatprep.subr.mxu0 0.0
        %820 = vmatpush1.msra.mxu0 0.0
        %821 = vmatprep.subr.mxu0 0.0
        %822 = vmatpush1.msra.mxu0 0.0
        %823 = vmatprep.subr.mxu0 0.0
        %824 = vmatpush1.msra.mxu0 0.0
        %825 = vmatprep.subr.mxu0 0.0
        %826 = vmatpush1.msra.mxu0 0.0
        %827 = vmatprep.subr.mxu0 0.0
        %828 = vmatpush1.msra.mxu0 0.0
        %829 = vmatprep.subr.mxu0 0.0
        %830 = vmatpush1.msra.mxu0 0.0
        %831 = vmatprep.subr.mxu0 0.0
        %832 = vmatpush1.msra.mxu0 0.0
        %833 = vmatprep.subr.mxu0 0.0
        %834 = vmatpush1.msra.mxu0 0.0
        %835 = vmatprep.subr.mxu0 0.0
        %836 = vmatpush1.msra.mxu0 0.0
        %837 = vmatprep.subr.mxu0 0.0
        %838 = vmatpush1.msra.mxu0 %v602
        %839 = vmatprep.subr.mxu0 0.0
        %840 = vmatpush1.msra.mxu0 %v601
        %841 = vmatprep.subr.mxu0 0.0
        %842 = vmatpush1.msra.mxu0 %v600
        %843 = vmatprep.subr.mxu0 0.0
        %844 = vmatpush1.msra.mxu0 %v599
        %845 = vmatprep.subr.mxu0 0.0
        %846 = vmatpush2.msra.mxu0 0.0
        %847 = vmatprep.subr.mxu0 0.0
        %848 = vmatpush2.msra.mxu0 0.0
        %849 = vmatprep.subr.mxu0 0.0
        %850 = vmatpush2.msra.mxu0 0.0
        %851 = vmatprep.subr.mxu0 0.0
        %852 = vmatpush2.msra.mxu0 0.0
        %853 = vmatprep.subr.mxu0 0.0
        %854 = vmatpush2.msra.mxu0 0.0
        %855 = vmatprep.subr.mxu0 0.0
        %856 = vmatpush2.msra.mxu0 0.0
        %857 = vmatprep.subr.mxu0 0.0
        %858 = vmatpush2.msra.mxu0 0.0
        %859 = vmatprep.subr.mxu0 0.0
        %860 = vmatpush2.msra.mxu0 0.0
        %861 = vmatprep.subr.mxu0 0.0
        %862 = vmatpush2.msra.mxu0 0.0
        %863 = vmatprep.subr.mxu0 0.0
        %864 = vmatpush2.msra.mxu0 0.0
        %865 = vmatprep.subr.mxu0 0.0
        %866 = vmatpush2.msra.mxu0 0.0
        %867 = vmatprep.subr.mxu0 0.0
        %868 = vmatpush2.msra.mxu0 0.0
        %869 = vmatprep.subr.mxu0 0.0
        %870 = vmatpush2.msra.mxu0 0.0
        %871 = vmatprep.subr.mxu0 0.0
        %872 = vmatpush2.msra.mxu0 0.0
        %873 = vmatprep.subr.mxu0 0.0
        %874 = vmatpush2.msra.mxu0 0.0
        %875 = vmatprep.subr.mxu0 0.0
        %876 = vmatpush2.msra.mxu0 0.0
        %877 = vmatprep.mubr.f32.mxu0 0.0
        %878 = vmatmul.mubr.f32.gmra.mxu0 %v305
        %v879 = vpop.f32.mrf.mxu0
        %v880 = vadd.f32 0.0, %v879
        %v881 = vpop.f32.mrf.mxu0
        %882 = vdwg.mxu0
        %v883 = vld [vmem:[%s4] sm:$0xff]
        %v884 = vld [vmem:[%s4 + $0x8] sm:$0xff]
        %v885 = vld [vmem:[%s4 + $0x10] sm:$0xff]
        %v886 = vld [vmem:[%s4 + $0x18] sm:$0xff]
        %v887 = vld [vmem:[%s4 + $0x20] sm:$0xff]
        %v888 = vld [vmem:[%s4 + $0x28] sm:$0xff]
        %v889 = vld [vmem:[%s4 + $0x30] sm:$0xff]
        %v890 = vld [vmem:[%s4 + $0x38] sm:$0xff]
        %v891 = vld [vmem:[%s4 + $0x40] sm:$0xff]
        %v892 = vld [vmem:[%s4 + $0x48] sm:$0xff]
        %v893 = vld [vmem:[%s4 + $0x50] sm:$0xff]
        %v894 = vld [vmem:[%s4 + $0x58] sm:$0xff]
        %v895 = vld [vmem:[%s4 + $0x60] sm:$0xff]
        %v896 = vld [vmem:[%s4 + $0x68] sm:$0xff]
        %v897 = vld [vmem:[%s4 + $0x70] sm:$0xff]
        %v898 = vld [vmem:[%s4 + $0x78] sm:$0xff]
        %v900 = vsel %vm303, %v284, 0
        %902 = vmatprep.subr.mxu0 0.0
        %903 = vmatpush1.msra.mxu0 0.0
        %904 = vmatprep.subr.mxu0 0.0
        %905 = vmatpush1.msra.mxu0 0.0
        %906 = vmatprep.subr.mxu0 0.0
        %907 = vmatpush1.msra.mxu0 0.0
        %908 = vmatprep.subr.mxu0 0.0
        %909 = vmatpush1.msra.mxu0 0.0
        %910 = vmatprep.subr.mxu0 0.0
        %911 = vmatpush1.msra.mxu0 0.0
        %912 = vmatprep.subr.mxu0 0.0
        %913 = vmatpush1.msra.mxu0 0.0
        %914 = vmatprep.subr.mxu0 0.0
        %915 = vmatpush1.msra.mxu0 0.0
        %916 = vmatprep.subr.mxu0 0.0
        %917 = vmatpush1.msra.mxu0 0.0
        %918 = vmatprep.subr.mxu0 0.0
        %919 = vmatpush1.msra.mxu0 0.0
        %920 = vmatprep.subr.mxu0 0.0
        %921 = vmatpush1.msra.mxu0 0.0
        %922 = vmatprep.subr.mxu0 0.0
        %923 = vmatpush1.msra.mxu0 0.0
        %924 = vmatprep.subr.mxu0 0.0
        %925 = vmatpush1.msra.mxu0 0.0
        %926 = vmatprep.subr.mxu0 0.0
        %927 = vmatpush1.msra.mxu0 %v886
        %928 = vmatprep.subr.mxu0 0.0
        %929 = vmatpush1.msra.mxu0 %v885
        %930 = vmatprep.subr.mxu0 0.0
        %931 = vmatpush1.msra.mxu0 %v884
        %932 = vmatprep.subr.mxu0 0.0
        %933 = vmatpush1.msra.mxu0 %v883
        %934 = vmatprep.subr.mxu0 0.0
        %935 = vmatpush2.msra.mxu0 0.0
        %936 = vmatprep.subr.mxu0 0.0
        %937 = vmatpush2.msra.mxu0 0.0
        %938 = vmatprep.subr.mxu0 0.0
        %939 = vmatpush2.msra.mxu0 0.0
        %940 = vmatprep.subr.mxu0 0.0
        %941 = vmatpush2.msra.mxu0 0.0
        %942 = vmatprep.subr.mxu0 0.0
        %943 = vmatpush2.msra.mxu0 0.0
        %944 = vmatprep.subr.mxu0 0.0
        %945 = vmatpush2.msra.mxu0 0.0
        %946 = vmatprep.subr.mxu0 0.0
        %947 = vmatpush2.msra.mxu0 0.0
        %948 = vmatprep.subr.mxu0 0.0
        %949 = vmatpush2.msra.mxu0 0.0
        %950 = vmatprep.subr.mxu0 0.0
        %951 = vmatpush2.msra.mxu0 0.0
        %952 = vmatprep.subr.mxu0 0.0
        %953 = vmatpush2.msra.mxu0 0.0
        %954 = vmatprep.subr.mxu0 0.0
        %955 = vmatpush2.msra.mxu0 0.0
        %956 = vmatprep.subr.mxu0 0.0
        %957 = vmatpush2.msra.mxu0 0.0
        %958 = vmatprep.subr.mxu0 0.0
        %959 = vmatpush2.msra.mxu0 0.0
        %960 = vmatprep.subr.mxu0 0.0
        %961 = vmatpush2.msra.mxu0 0.0
        %962 = vmatprep.subr.mxu0 0.0
        %963 = vmatpush2.msra.mxu0 0.0
        %964 = vmatprep.subr.mxu0 0.0
        %965 = vmatpush2.msra.mxu0 0.0
        %966 = vmatprep.mubr.f32.mxu0 0.0
        %967 = vmatmul.mubr.f32.gmra.mxu0 %v900
        %v968 = vpop.f32.mrf.mxu0
        %v969 = vadd.f32 0.0, %v968
        %v970 = vpop.f32.mrf.mxu0
        %971 = vdwg.mxu0
        %972 = vmatprep.subr.mxu0 0.0
        %973 = vmatpush1.msra.mxu0 0.0
        %974 = vmatprep.subr.mxu0 0.0
        %975 = vmatpush1.msra.mxu0 0.0
        %976 = vmatprep.subr.mxu0 0.0
        %977 = vmatpush1.msra.mxu0 0.0
        %978 = vmatprep.subr.mxu0 0.0
        %979 = vmatpush1.msra.mxu0 0.0
        %980 = vmatprep.subr.mxu0 0.0
        %981 = vmatpush1.msra.mxu0 0.0
        %982 = vmatprep.subr.mxu0 0.0
        %983 = vmatpush1.msra.mxu0 0.0
        %984 = vmatprep.subr.mxu0 0.0
        %985 = vmatpush1.msra.mxu0 0.0
        %986 = vmatprep.subr.mxu0 0.0
        %987 = vmatpush1.msra.mxu0 0.0
        %988 = vmatprep.subr.mxu0 0.0
        %989 = vmatpush1.msra.mxu0 0.0
        %990 = vmatprep.subr.mxu0 0.0
        %991 = vmatpush1.msra.mxu0 0.0
        %992 = vmatprep.subr.mxu0 0.0
        %993 = vmatpush1.msra.mxu0 0.0
        %994 = vmatprep.subr.mxu0 0.0
        %995 = vmatpush1.msra.mxu0 0.0
        %996 = vmatprep.subr.mxu0 0.0
        %997 = vmatpush1.msra.mxu0 %v890
        %998 = vmatprep.subr.mxu0 0.0
        %999 = vmatpush1.msra.mxu0 %v889
        %1000 = vmatprep.subr.mxu0 0.0
        %1001 = vmatpush1.msra.mxu0 %v888
        %1002 = vmatprep.subr.mxu0 0.0
        %1003 = vmatpush1.msra.mxu0 %v887
        %1004 = vmatprep.subr.mxu0 0.0
        %1005 = vmatpush2.msra.mxu0 0.0
        %1006 = vmatprep.subr.mxu0 0.0
        %1007 = vmatpush2.msra.mxu0 0.0
        %1008 = vmatprep.subr.mxu0 0.0
        %1009 = vmatpush2.msra.mxu0 0.0
        %1010 = vmatprep.subr.mxu0 0.0
        %1011 = vmatpush2.msra.mxu0 0.0
        %1012 = vmatprep.subr.mxu0 0.0
        %1013 = vmatpush2.msra.mxu0 0.0
        %1014 = vmatprep.subr.mxu0 0.0
        %1015 = vmatpush2.msra.mxu0 0.0
        %1016 = vmatprep.subr.mxu0 0.0
        %1017 = vmatpush2.msra.mxu0 0.0
        %1018 = vmatprep.subr.mxu0 0.0
        %1019 = vmatpush2.msra.mxu0 0.0
        %1020 = vmatprep.subr.mxu0 0.0
        %1021 = vmatpush2.msra.mxu0 0.0
        %1022 = vmatprep.subr.mxu0 0.0
        %1023 = vmatpush2.msra.mxu0 0.0
        %1024 = vmatprep.subr.mxu0 0.0
        %1025 = vmatpush2.msra.mxu0 0.0
        %1026 = vmatprep.subr.mxu0 0.0
        %1027 = vmatpush2.msra.mxu0 0.0
        %1028 = vmatprep.subr.mxu0 0.0
        %1029 = vmatpush2.msra.mxu0 0.0
        %1030 = vmatprep.subr.mxu0 0.0
        %1031 = vmatpush2.msra.mxu0 0.0
        %1032 = vmatprep.subr.mxu0 0.0
        %1033 = vmatpush2.msra.mxu0 0.0
        %1034 = vmatprep.subr.mxu0 0.0
        %1035 = vmatpush2.msra.mxu0 0.0
        %1036 = vmatprep.mubr.f32.mxu0 0.0
        %1037 = vmatmul.mubr.f32.gmra.mxu0 %v900
        %v1038 = vpop.f32.mrf.mxu0
        %v1039 = vadd.f32 0.0, %v1038
        %v1040 = vpop.f32.mrf.mxu0
        %1041 = vdwg.mxu0
        %1042 = vmatprep.subr.mxu0 0.0
        %1043 = vmatpush1.msra.mxu0 0.0
        %1044 = vmatprep.subr.mxu0 0.0
        %1045 = vmatpush1.msra.mxu0 0.0
        %1046 = vmatprep.subr.mxu0 0.0
        %1047 = vmatpush1.msra.mxu0 0.0
        %1048 = vmatprep.subr.mxu0 0.0
        %1049 = vmatpush1.msra.mxu0 0.0
        %1050 = vmatprep.subr.mxu0 0.0
        %1051 = vmatpush1.msra.mxu0 0.0
        %1052 = vmatprep.subr.mxu0 0.0
        %1053 = vmatpush1.msra.mxu0 0.0
        %1054 = vmatprep.subr.mxu0 0.0
        %1055 = vmatpush1.msra.mxu0 0.0
        %1056 = vmatprep.subr.mxu0 0.0
        %1057 = vmatpush1.msra.mxu0 0.0
        %1058 = vmatprep.subr.mxu0 0.0
        %1059 = vmatpush1.msra.mxu0 0.0
        %1060 = vmatprep.subr.mxu0 0.0
        %1061 = vmatpush1.msra.mxu0 0.0
        %1062 = vmatprep.subr.mxu0 0.0
        %1063 = vmatpush1.msra.mxu0 0.0
        %1064 = vmatprep.subr.mxu0 0.0
        %1065 = vmatpush1.msra.mxu0 0.0
        %1066 = vmatprep.subr.mxu0 0.0
        %1067 = vmatpush1.msra.mxu0 %v894
        %1068 = vmatprep.subr.mxu0 0.0
        %1069 = vmatpush1.msra.mxu0 %v893
        %1070 = vmatprep.subr.mxu0 0.0
        %1071 = vmatpush1.msra.mxu0 %v892
        %1072 = vmatprep.subr.mxu0 0.0
        %1073 = vmatpush1.msra.mxu0 %v891
        %1074 = vmatprep.subr.mxu0 0.0
        %1075 = vmatpush2.msra.mxu0 0.0
        %1076 = vmatprep.subr.mxu0 0.0
        %1077 = vmatpush2.msra.mxu0 0.0
        %1078 = vmatprep.subr.mxu0 0.0
        %1079 = vmatpush2.msra.mxu0 0.0
        %1080 = vmatprep.subr.mxu0 0.0
        %1081 = vmatpush2.msra.mxu0 0.0
        %1082 = vmatprep.subr.mxu0 0.0
        %1083 = vmatpush2.msra.mxu0 0.0
        %1084 = vmatprep.subr.mxu0 0.0
        %1085 = vmatpush2.msra.mxu0 0.0
        %1086 = vmatprep.subr.mxu0 0.0
        %1087 = vmatpush2.msra.mxu0 0.0
        %1088 = vmatprep.subr.mxu0 0.0
        %1089 = vmatpush2.msra.mxu0 0.0
        %1090 = vmatprep.subr.mxu0 0.0
        %1091 = vmatpush2.msra.mxu0 0.0
        %1092 = vmatprep.subr.mxu0 0.0
        %1093 = vmatpush2.msra.mxu0 0.0
        %1094 = vmatprep.subr.mxu0 0.0
        %1095 = vmatpush2.msra.mxu0 0.0
        %1096 = vmatprep.subr.mxu0 0.0
        %1097 = vmatpush2.msra.mxu0 0.0
        %1098 = vmatprep.subr.mxu0 0.0
        %1099 = vmatpush2.msra.mxu0 0.0
        %1100 = vmatprep.subr.mxu0 0.0
        %1101 = vmatpush2.msra.mxu0 0.0
        %1102 = vmatprep.subr.mxu0 0.0
        %1103 = vmatpush2.msra.mxu0 0.0
        %1104 = vmatprep.subr.mxu0 0.0
        %1105 = vmatpush2.msra.mxu0 0.0
        %1106 = vmatprep.mubr.f32.mxu0 0.0
        %1107 = vmatmul.mubr.f32.gmra.mxu0 %v900
        %v1108 = vpop.f32.mrf.mxu0
        %v1109 = vadd.f32 0.0, %v1108
        %v1110 = vpop.f32.mrf.mxu0
        %1111 = vdwg.mxu0
        %1112 = vmatprep.subr.mxu0 0.0
        %1113 = vmatpush1.msra.mxu0 0.0
        %1114 = vmatprep.subr.mxu0 0.0
        %1115 = vmatpush1.msra.mxu0 0.0
        %1116 = vmatprep.subr.mxu0 0.0
        %1117 = vmatpush1.msra.mxu0 0.0
        %1118 = vmatprep.subr.mxu0 0.0
        %1119 = vmatpush1.msra.mxu0 0.0
        %1120 = vmatprep.subr.mxu0 0.0
        %1121 = vmatpush1.msra.mxu0 0.0
        %1122 = vmatprep.subr.mxu0 0.0
        %1123 = vmatpush1.msra.mxu0 0.0
        %1124 = vmatprep.subr.mxu0 0.0
        %1125 = vmatpush1.msra.mxu0 0.0
        %1126 = vmatprep.subr.mxu0 0.0
        %1127 = vmatpush1.msra.mxu0 0.0
        %1128 = vmatprep.subr.mxu0 0.0
        %1129 = vmatpush1.msra.mxu0 0.0
        %1130 = vmatprep.subr.mxu0 0.0
        %1131 = vmatpush1.msra.mxu0 0.0
        %1132 = vmatprep.subr.mxu0 0.0
        %1133 = vmatpush1.msra.mxu0 0.0
        %1134 = vmatprep.subr.mxu0 0.0
        %1135 = vmatpush1.msra.mxu0 0.0
        %1136 = vmatprep.subr.mxu0 0.0
        %1137 = vmatpush1.msra.mxu0 %v898
        %1138 = vmatprep.subr.mxu0 0.0
        %1139 = vmatpush1.msra.mxu0 %v897
        %1140 = vmatprep.subr.mxu0 0.0
        %1141 = vmatpush1.msra.mxu0 %v896
        %1142 = vmatprep.subr.mxu0 0.0
        %1143 = vmatpush1.msra.mxu0 %v895
        %1144 = vmatprep.subr.mxu0 0.0
        %1145 = vmatpush2.msra.mxu0 0.0
        %1146 = vmatprep.subr.mxu0 0.0
        %1147 = vmatpush2.msra.mxu0 0.0
        %1148 = vmatprep.subr.mxu0 0.0
        %1149 = vmatpush2.msra.mxu0 0.0
        %1150 = vmatprep.subr.mxu0 0.0
        %1151 = vmatpush2.msra.mxu0 0.0
        %1152 = vmatprep.subr.mxu0 0.0
        %1153 = vmatpush2.msra.mxu0 0.0
        %1154 = vmatprep.subr.mxu0 0.0
        %1155 = vmatpush2.msra.mxu0 0.0
        %1156 = vmatprep.subr.mxu0 0.0
        %1157 = vmatpush2.msra.mxu0 0.0
        %1158 = vmatprep.subr.mxu0 0.0
        %1159 = vmatpush2.msra.mxu0 0.0
        %1160 = vmatprep.subr.mxu0 0.0
        %1161 = vmatpush2.msra.mxu0 0.0
        %1162 = vmatprep.subr.mxu0 0.0
        %1163 = vmatpush2.msra.mxu0 0.0
        %1164 = vmatprep.subr.mxu0 0.0
        %1165 = vmatpush2.msra.mxu0 0.0
        %1166 = vmatprep.subr.mxu0 0.0
        %1167 = vmatpush2.msra.mxu0 0.0
        %1168 = vmatprep.subr.mxu0 0.0
        %1169 = vmatpush2.msra.mxu0 0.0
        %1170 = vmatprep.subr.mxu0 0.0
        %1171 = vmatpush2.msra.mxu0 0.0
        %1172 = vmatprep.subr.mxu0 0.0
        %1173 = vmatpush2.msra.mxu0 0.0
        %1174 = vmatprep.subr.mxu0 0.0
        %1175 = vmatpush2.msra.mxu0 0.0
        %1176 = vmatprep.mubr.f32.mxu0 0.0
        %1177 = vmatmul.mubr.f32.gmra.mxu0 %v900
        %v1178 = vpop.f32.mrf.mxu0
        %v1179 = vadd.f32 0.0, %v1178
        %v1180 = vpop.f32.mrf.mxu0
        %1181 = vdwg.mxu0
        %vm1182 = vcmask 64512
        %v1184 = vsel %vm1182, %v374, 0
        %v1187 = vsel %vm1182, %v670, 0
        %1189 = vmatprep.subr.mxu0 0.0
        %1190 = vmatpush1.xpose.msra.mxu0 0.0
        %1191 = vmatprep.subr.mxu0 0.0
        %1192 = vmatpush1.xpose.msra.mxu0 0.0
        %1193 = vmatprep.subr.mxu0 0.0
        %1194 = vmatpush1.xpose.msra.mxu0 0.0
        %1195 = vmatprep.subr.mxu0 0.0
        %1196 = vmatpush1.xpose.msra.mxu0 0.0
        %1197 = vmatprep.subr.mxu0 0.0
        %1198 = vmatpush1.xpose.msra.mxu0 0.0
        %1199 = vmatprep.subr.mxu0 0.0
        %1200 = vmatpush1.xpose.msra.mxu0 0.0
        %1201 = vmatprep.subr.mxu0 0.0
        %1202 = vmatpush1.xpose.msra.mxu0 0.0
        %1203 = vmatprep.subr.mxu0 0.0
        %1204 = vmatpush1.xpose.msra.mxu0 0.0
        %1205 = vmatprep.subr.mxu0 0.0
        %1206 = vmatpush1.xpose.msra.mxu0 0.0
        %1207 = vmatprep.subr.mxu0 0.0
        %1208 = vmatpush1.xpose.msra.mxu0 0.0
        %1209 = vmatprep.subr.mxu0 0.0
        %1210 = vmatpush1.xpose.msra.mxu0 0.0
        %1211 = vmatprep.subr.mxu0 0.0
        %1212 = vmatpush1.xpose.msra.mxu0 0.0
        %1213 = vmatprep.subr.mxu0 0.0
        %1214 = vmatpush1.xpose.msra.mxu0 0.0
        %1215 = vmatprep.subr.mxu0 0.0
        %1216 = vmatpush1.xpose.msra.mxu0 0.0
        %1217 = vmatprep.subr.mxu0 0.0
        %1218 = vmatpush1.xpose.msra.mxu0 0.0
        %1219 = vmatprep.subr.mxu0 0.0
        %1220 = vmatpush1.xpose.msra.mxu0 %v1187
        %1221 = vmatprep.subr.mxu0 0.0
        %1222 = vmatpush2.xpose.msra.mxu0 0.0
        %1223 = vmatprep.subr.mxu0 0.0
        %1224 = vmatpush2.xpose.msra.mxu0 0.0
        %1225 = vmatprep.subr.mxu0 0.0
        %1226 = vmatpush2.xpose.msra.mxu0 0.0
        %1227 = vmatprep.subr.mxu0 0.0
        %1228 = vmatpush2.xpose.msra.mxu0 0.0
        %1229 = vmatprep.subr.mxu0 0.0
        %1230 = vmatpush2.xpose.msra.mxu0 0.0
        %1231 = vmatprep.subr.mxu0 0.0
        %1232 = vmatpush2.xpose.msra.mxu0 0.0
        %1233 = vmatprep.subr.mxu0 0.0
        %1234 = vmatpush2.xpose.msra.mxu0 0.0
        %1235 = vmatprep.subr.mxu0 0.0
        %1236 = vmatpush2.xpose.msra.mxu0 0.0
        %1237 = vmatprep.subr.mxu0 0.0
        %1238 = vmatpush2.xpose.msra.mxu0 0.0
        %1239 = vmatprep.subr.mxu0 0.0
        %1240 = vmatpush2.xpose.msra.mxu0 0.0
        %1241 = vmatprep.subr.mxu0 0.0
        %1242 = vmatpush2.xpose.msra.mxu0 0.0
        %1243 = vmatprep.subr.mxu0 0.0
        %1244 = vmatpush2.xpose.msra.mxu0 0.0
        %1245 = vmatprep.subr.mxu0 0.0
        %1246 = vmatpush2.xpose.msra.mxu0 0.0
        %1247 = vmatprep.subr.mxu0 0.0
        %1248 = vmatpush2.xpose.msra.mxu0 0.0
        %1249 = vmatprep.subr.mxu0 0.0
        %1250 = vmatpush2.xpose.msra.mxu0 0.0
        %1251 = vmatprep.subr.mxu0 0.0
        %1252 = vmatpush2.xpose.msra.mxu0 0.0
        %1253 = vmatprep.mubr.f32.mxu0 0.0
        %1254 = vmatmul.mubr.f32.gmra.mxu0 %v1184
        %v1255 = vpop.f32.mrf.mxu0
        %v1256 = vadd.f32 0.0, %v1255
        %v1257 = vpop.f32.mrf.mxu0
        %1258 = vdwg.mxu0
        %v1260 = vsel %vm1182, %v444, 0
        %v1263 = vsel %vm1182, %v740, 0
        %1265 = vmatprep.subr.mxu0 0.0
        %1266 = vmatpush1.xpose.msra.mxu0 0.0
        %1267 = vmatprep.subr.mxu0 0.0
        %1268 = vmatpush1.xpose.msra.mxu0 0.0
        %1269 = vmatprep.subr.mxu0 0.0
        %1270 = vmatpush1.xpose.msra.mxu0 0.0
        %1271 = vmatprep.subr.mxu0 0.0
        %1272 = vmatpush1.xpose.msra.mxu0 0.0
        %1273 = vmatprep.subr.mxu0 0.0
        %1274 = vmatpush1.xpose.msra.mxu0 0.0
        %1275 = vmatprep.subr.mxu0 0.0
        %1276 = vmatpush1.xpose.msra.mxu0 0.0
        %1277 = vmatprep.subr.mxu0 0.0
        %1278 = vmatpush1.xpose.msra.mxu0 0.0
        %1279 = vmatprep.subr.mxu0 0.0
        %1280 = vmatpush1.xpose.msra.mxu0 0.0
        %1281 = vmatprep.subr.mxu0 0.0
        %1282 = vmatpush1.xpose.msra.mxu0 0.0
        %1283 = vmatprep.subr.mxu0 0.0
        %1284 = vmatpush1.xpose.msra.mxu0 0.0
        %1285 = vmatprep.subr.mxu0 0.0
        %1286 = vmatpush1.xpose.msra.mxu0 0.0
        %1287 = vmatprep.subr.mxu0 0.0
        %1288 = vmatpush1.xpose.msra.mxu0 0.0
        %1289 = vmatprep.subr.mxu0 0.0
        %1290 = vmatpush1.xpose.msra.mxu0 0.0
        %1291 = vmatprep.subr.mxu0 0.0
        %1292 = vmatpush1.xpose.msra.mxu0 0.0
        %1293 = vmatprep.subr.mxu0 0.0
        %1294 = vmatpush1.xpose.msra.mxu0 0.0
        %1295 = vmatprep.subr.mxu0 0.0
        %1296 = vmatpush1.xpose.msra.mxu0 %v1263
        %1297 = vmatprep.subr.mxu0 0.0
        %1298 = vmatpush2.xpose.msra.mxu0 0.0
        %1299 = vmatprep.subr.mxu0 0.0
        %1300 = vmatpush2.xpose.msra.mxu0 0.0
        %1301 = vmatprep.subr.mxu0 0.0
        %1302 = vmatpush2.xpose.msra.mxu0 0.0
        %1303 = vmatprep.subr.mxu0 0.0
        %1304 = vmatpush2.xpose.msra.mxu0 0.0
        %1305 = vmatprep.subr.mxu0 0.0
        %1306 = vmatpush2.xpose.msra.mxu0 0.0
        %1307 = vmatprep.subr.mxu0 0.0
        %1308 = vmatpush2.xpose.msra.mxu0 0.0
        %1309 = vmatprep.subr.mxu0 0.0
        %1310 = vmatpush2.xpose.msra.mxu0 0.0
        %1311 = vmatprep.subr.mxu0 0.0
        %1312 = vmatpush2.xpose.msra.mxu0 0.0
        %1313 = vmatprep.subr.mxu0 0.0
        %1314 = vmatpush2.xpose.msra.mxu0 0.0
        %1315 = vmatprep.subr.mxu0 0.0
        %1316 = vmatpush2.xpose.msra.mxu0 0.0
        %1317 = vmatprep.subr.mxu0 0.0
        %1318 = vmatpush2.xpose.msra.mxu0 0.0
        %1319 = vmatprep.subr.mxu0 0.0
        %1320 = vmatpush2.xpose.msra.mxu0 0.0
        %1321 = vmatprep.subr.mxu0 0.0
        %1322 = vmatpush2.xpose.msra.mxu0 0.0
        %1323 = vmatprep.subr.mxu0 0.0
        %1324 = vmatpush2.xpose.msra.mxu0 0.0
        %1325 = vmatprep.subr.mxu0 0.0
        %1326 = vmatpush2.xpose.msra.mxu0 0.0
        %1327 = vmatprep.subr.mxu0 0.0
        %1328 = vmatpush2.xpose.msra.mxu0 0.0
        %1329 = vmatprep.mubr.f32.mxu0 0.0
        %1330 = vmatmul.mubr.f32.gmra.mxu0 %v1260
        %v1331 = vpop.f32.mrf.mxu0
        %v1332 = vadd.f32 0.0, %v1331
        %v1333 = vpop.f32.mrf.mxu0
        %1334 = vdwg.mxu0
        %v1336 = vsel %vm1182, %v514, 0
        %v1339 = vsel %vm1182, %v810, 0
        %1341 = vmatprep.subr.mxu0 0.0
        %1342 = vmatpush1.xpose.msra.mxu0 0.0
        %1343 = vmatprep.subr.mxu0 0.0
        %1344 = vmatpush1.xpose.msra.mxu0 0.0
        %1345 = vmatprep.subr.mxu0 0.0
        %1346 = vmatpush1.xpose.msra.mxu0 0.0
        %1347 = vmatprep.subr.mxu0 0.0
        %1348 = vmatpush1.xpose.msra.mxu0 0.0
        %1349 = vmatprep.subr.mxu0 0.0
        %1350 = vmatpush1.xpose.msra.mxu0 0.0
        %1351 = vmatprep.subr.mxu0 0.0
        %1352 = vmatpush1.xpose.msra.mxu0 0.0
        %1353 = vmatprep.subr.mxu0 0.0
        %1354 = vmatpush1.xpose.msra.mxu0 0.0
        %1355 = vmatprep.subr.mxu0 0.0
        %1356 = vmatpush1.xpose.msra.mxu0 0.0
        %1357 = vmatprep.subr.mxu0 0.0
        %1358 = vmatpush1.xpose.msra.mxu0 0.0
        %1359 = vmatprep.subr.mxu0 0.0
        %1360 = vmatpush1.xpose.msra.mxu0 0.0
        %1361 = vmatprep.subr.mxu0 0.0
        %1362 = vmatpush1.xpose.msra.mxu0 0.0
        %1363 = vmatprep.subr.mxu0 0.0
        %1364 = vmatpush1.xpose.msra.mxu0 0.0
        %1365 = vmatprep.subr.mxu0 0.0
        %1366 = vmatpush1.xpose.msra.mxu0 0.0
        %1367 = vmatprep.subr.mxu0 0.0
        %1368 = vmatpush1.xpose.msra.mxu0 0.0
        %1369 = vmatprep.subr.mxu0 0.0
        %1370 = vmatpush1.xpose.msra.mxu0 0.0
        %1371 = vmatprep.subr.mxu0 0.0
        %1372 = vmatpush1.xpose.msra.mxu0 %v1339
        %1373 = vmatprep.subr.mxu0 0.0
        %1374 = vmatpush2.xpose.msra.mxu0 0.0
        %1375 = vmatprep.subr.mxu0 0.0
        %1376 = vmatpush2.xpose.msra.mxu0 0.0
        %1377 = vmatprep.subr.mxu0 0.0
        %1378 = vmatpush2.xpose.msra.mxu0 0.0
        %1379 = vmatprep.subr.mxu0 0.0
        %1380 = vmatpush2.xpose.msra.mxu0 0.0
        %1381 = vmatprep.subr.mxu0 0.0
        %1382 = vmatpush2.xpose.msra.mxu0 0.0
        %1383 = vmatprep.subr.mxu0 0.0
        %1384 = vmatpush2.xpose.msra.mxu0 0.0
        %1385 = vmatprep.subr.mxu0 0.0
        %1386 = vmatpush2.xpose.msra.mxu0 0.0
        %1387 = vmatprep.subr.mxu0 0.0
        %1388 = vmatpush2.xpose.msra.mxu0 0.0
        %1389 = vmatprep.subr.mxu0 0.0
        %1390 = vmatpush2.xpose.msra.mxu0 0.0
        %1391 = vmatprep.subr.mxu0 0.0
        %1392 = vmatpush2.xpose.msra.mxu0 0.0
        %1393 = vmatprep.subr.mxu0 0.0
        %1394 = vmatpush2.xpose.msra.mxu0 0.0
        %1395 = vmatprep.subr.mxu0 0.0
        %1396 = vmatpush2.xpose.msra.mxu0 0.0
        %1397 = vmatprep.subr.mxu0 0.0
        %1398 = vmatpush2.xpose.msra.mxu0 0.0
        %1399 = vmatprep.subr.mxu0 0.0
        %1400 = vmatpush2.xpose.msra.mxu0 0.0
        %1401 = vmatprep.subr.mxu0 0.0
        %1402 = vmatpush2.xpose.msra.mxu0 0.0
        %1403 = vmatprep.subr.mxu0 0.0
        %1404 = vmatpush2.xpose.msra.mxu0 0.0
        %1405 = vmatprep.mubr.f32.mxu0 0.0
        %1406 = vmatmul.mubr.f32.gmra.mxu0 %v1336
        %v1407 = vpop.f32.mrf.mxu0
        %v1408 = vadd.f32 0.0, %v1407
        %v1409 = vpop.f32.mrf.mxu0
        %1410 = vdwg.mxu0
        %v1412 = vsel %vm1182, %v584, 0
        %v1415 = vsel %vm1182, %v880, 0
        %1417 = vmatprep.subr.mxu0 0.0
        %1418 = vmatpush1.xpose.msra.mxu0 0.0
        %1419 = vmatprep.subr.mxu0 0.0
        %1420 = vmatpush1.xpose.msra.mxu0 0.0
        %1421 = vmatprep.subr.mxu0 0.0
        %1422 = vmatpush1.xpose.msra.mxu0 0.0
        %1423 = vmatprep.subr.mxu0 0.0
        %1424 = vmatpush1.xpose.msra.mxu0 0.0
        %1425 = vmatprep.subr.mxu0 0.0
        %1426 = vmatpush1.xpose.msra.mxu0 0.0
        %1427 = vmatprep.subr.mxu0 0.0
        %1428 = vmatpush1.xpose.msra.mxu0 0.0
        %1429 = vmatprep.subr.mxu0 0.0
        %1430 = vmatpush1.xpose.msra.mxu0 0.0
        %1431 = vmatprep.subr.mxu0 0.0
        %1432 = vmatpush1.xpose.msra.mxu0 0.0
        %1433 = vmatprep.subr.mxu0 0.0
        %1434 = vmatpush1.xpose.msra.mxu0 0.0
        %1435 = vmatprep.subr.mxu0 0.0
        %1436 = vmatpush1.xpose.msra.mxu0 0.0
        %1437 = vmatprep.subr.mxu0 0.0
        %1438 = vmatpush1.xpose.msra.mxu0 0.0
        %1439 = vmatprep.subr.mxu0 0.0
        %1440 = vmatpush1.xpose.msra.mxu0 0.0
        %1441 = vmatprep.subr.mxu0 0.0
        %1442 = vmatpush1.xpose.msra.mxu0 0.0
        %1443 = vmatprep.subr.mxu0 0.0
        %1444 = vmatpush1.xpose.msra.mxu0 0.0
        %1445 = vmatprep.subr.mxu0 0.0
        %1446 = vmatpush1.xpose.msra.mxu0 0.0
        %1447 = vmatprep.subr.mxu0 0.0
        %1448 = vmatpush1.xpose.msra.mxu0 %v1415
        %1449 = vmatprep.subr.mxu0 0.0
        %1450 = vmatpush2.xpose.msra.mxu0 0.0
        %1451 = vmatprep.subr.mxu0 0.0
        %1452 = vmatpush2.xpose.msra.mxu0 0.0
        %1453 = vmatprep.subr.mxu0 0.0
        %1454 = vmatpush2.xpose.msra.mxu0 0.0
        %1455 = vmatprep.subr.mxu0 0.0
        %1456 = vmatpush2.xpose.msra.mxu0 0.0
        %1457 = vmatprep.subr.mxu0 0.0
        %1458 = vmatpush2.xpose.msra.mxu0 0.0
        %1459 = vmatprep.subr.mxu0 0.0
        %1460 = vmatpush2.xpose.msra.mxu0 0.0
        %1461 = vmatprep.subr.mxu0 0.0
        %1462 = vmatpush2.xpose.msra.mxu0 0.0
        %1463 = vmatprep.subr.mxu0 0.0
        %1464 = vmatpush2.xpose.msra.mxu0 0.0
        %1465 = vmatprep.subr.mxu0 0.0
        %1466 = vmatpush2.xpose.msra.mxu0 0.0
        %1467 = vmatprep.subr.mxu0 0.0
        %1468 = vmatpush2.xpose.msra.mxu0 0.0
        %1469 = vmatprep.subr.mxu0 0.0
        %1470 = vmatpush2.xpose.msra.mxu0 0.0
        %1471 = vmatprep.subr.mxu0 0.0
        %1472 = vmatpush2.xpose.msra.mxu0 0.0
        %1473 = vmatprep.subr.mxu0 0.0
        %1474 = vmatpush2.xpose.msra.mxu0 0.0
        %1475 = vmatprep.subr.mxu0 0.0
        %1476 = vmatpush2.xpose.msra.mxu0 0.0
        %1477 = vmatprep.subr.mxu0 0.0
        %1478 = vmatpush2.xpose.msra.mxu0 0.0
        %1479 = vmatprep.subr.mxu0 0.0
        %1480 = vmatpush2.xpose.msra.mxu0 0.0
        %1481 = vmatprep.mubr.f32.mxu0 0.0
        %1482 = vmatmul.mubr.f32.gmra.mxu0 %v1412
        %v1483 = vpop.f32.mrf.mxu0
        %v1484 = vadd.f32 0.0, %v1483
        %v1485 = vpop.f32.mrf.mxu0
        %1486 = vdwg.mxu0
        %v1487 = vlaneseq
        %v1488 = vshrl.u32 %v1487, 7
        %v1489 = vlaneseq
        %v1490 = vand.u32 %v1489, 127
        %vm1491 = vcmp.le.s32.totalorder %v1490, %v1488
        %v1492 = vsel %vm1491, 1, 0
        %vm1493 = vcmp.eq.s32.totalorder %v1492, 1
        %v1494 = vsel %vm1493, %v1256, -100000.0
        %v1495 = vsel %vm1493, %v1332, -100000.0
        %v1496 = vsel %vm1493, %v1408, -100000.0
        %v1497 = vsel %vm1493, %v1484, -100000.0
        %v1498 = vsel %vm1182, %v1494, -inf
        %1499 = vmax.xlane.f32.xlu0 %v1498
        %v1500 = vpop.xlane.xlu0 %1499
        %v1501 = vsel %vm1182, %v1495, -inf
        %1502 = vmax.xlane.f32.xlu0 %v1501
        %v1503 = vpop.xlane.xlu0 %1502
        %v1504 = vsel %vm1182, %v1496, -inf
        %1505 = vmax.xlane.f32.xlu0 %v1504
        %v1506 = vpop.xlane.xlu0 %1505
        %v1507 = vsel %vm1182, %v1497, -inf
        %1508 = vmax.xlane.f32.xlu0 %v1507
        %v1509 = vpop.xlane.xlu0 %1508
        %v1510 = vsub.f32 %v1494, %v1500
        %v1511 = vsub.f32 %v1495, %v1503
        %v1512 = vsub.f32 %v1496, %v1506
        %v1513 = vsub.f32 %v1497, %v1509
        %v1514 = vmul.f32 %v1510, 1.442695
        %v1515 = vpow.pop %v1514
        %v1516 = vmul.f32 %v1511, 1.442695
        %v1517 = vpow.pop %v1516
        %v1518 = vmul.f32 %v1512, 1.442695
        %v1519 = vpow.pop %v1518
        %v1520 = vmul.f32 %v1513, 1.442695
        %v1521 = vpow.pop %v1520
        %v1522 = vsel %vm1182, %v1515, 0.0
        %1523 = vadd.xlane.f32.xlu0 %v1522
        %v1524 = vpop.xlane.xlu0 %1523
        %v1525 = vsel %vm1182, %v1517, 0.0
        %1526 = vadd.xlane.f32.xlu0 %v1525
        %v1527 = vpop.xlane.xlu0 %1526
        %v1528 = vsel %vm1182, %v1519, 0.0
        %1529 = vadd.xlane.f32.xlu0 %v1528
        %v1530 = vpop.xlane.xlu0 %1529
        %v1531 = vsel %vm1182, %v1521, 0.0
        %1532 = vadd.xlane.f32.xlu0 %v1531
        %v1533 = vpop.xlane.xlu0 %1532
        %v1534 = vrcp.pop %v1524
        %v1535 = vrcp.pop %v1527
        %v1536 = vrcp.pop %v1530
        %v1537 = vrcp.pop %v1533
        %v1538 = vmul.f32 %v1515, %v1534
        %v1539 = vmul.f32 %v1517, %v1535
        %v1540 = vmul.f32 %v1519, %v1536
        %v1541 = vmul.f32 %v1521, %v1537
        %v1543 = vsel %vm1182, %v1538, 0
        %1545 = vmatprep.subr.mxu0 0.0
        %1546 = vmatpush1.msra.mxu0 0.0
        %1547 = vmatprep.subr.mxu0 0.0
        %1548 = vmatpush1.msra.mxu0 0.0
        %1549 = vmatprep.subr.mxu0 0.0
        %1550 = vmatpush1.msra.mxu0 0.0
        %1551 = vmatprep.subr.mxu0 0.0
        %1552 = vmatpush1.msra.mxu0 0.0
        %1553 = vmatprep.subr.mxu0 0.0
        %1554 = vmatpush1.msra.mxu0 0.0
        %1555 = vmatprep.subr.mxu0 0.0
        %1556 = vmatpush1.msra.mxu0 0.0
        %1557 = vmatprep.subr.mxu0 0.0
        %1558 = vmatpush1.msra.mxu0 0.0
        %1559 = vmatprep.subr.mxu0 0.0
        %1560 = vmatpush1.msra.mxu0 0.0
        %1561 = vmatprep.subr.mxu0 0.0
        %1562 = vmatpush1.msra.mxu0 0.0
        %1563 = vmatprep.subr.mxu0 0.0
        %1564 = vmatpush1.msra.mxu0 0.0
        %1565 = vmatprep.subr.mxu0 0.0
        %1566 = vmatpush1.msra.mxu0 0.0
        %1567 = vmatprep.subr.mxu0 0.0
        %1568 = vmatpush1.msra.mxu0 0.0
        %1569 = vmatprep.subr.mxu0 0.0
        %1570 = vmatpush1.msra.mxu0 0.0
        %1571 = vmatprep.subr.mxu0 0.0
        %1572 = vmatpush1.msra.mxu0 0.0
        %1573 = vmatprep.subr.mxu0 0.0
        %1574 = vmatpush1.msra.mxu0 0.0
        %1575 = vmatprep.subr.mxu0 0.0
        %1576 = vmatpush1.msra.mxu0 %v969
        %1577 = vmatprep.subr.mxu0 0.0
        %1578 = vmatpush2.msra.mxu0 0.0
        %1579 = vmatprep.subr.mxu0 0.0
        %1580 = vmatpush2.msra.mxu0 0.0
        %1581 = vmatprep.subr.mxu0 0.0
        %1582 = vmatpush2.msra.mxu0 0.0
        %1583 = vmatprep.subr.mxu0 0.0
        %1584 = vmatpush2.msra.mxu0 0.0
        %1585 = vmatprep.subr.mxu0 0.0
        %1586 = vmatpush2.msra.mxu0 0.0
        %1587 = vmatprep.subr.mxu0 0.0
        %1588 = vmatpush2.msra.mxu0 0.0
        %1589 = vmatprep.subr.mxu0 0.0
        %1590 = vmatpush2.msra.mxu0 0.0
        %1591 = vmatprep.subr.mxu0 0.0
        %1592 = vmatpush2.msra.mxu0 0.0
        %1593 = vmatprep.subr.mxu0 0.0
        %1594 = vmatpush2.msra.mxu0 0.0
        %1595 = vmatprep.subr.mxu0 0.0
        %1596 = vmatpush2.msra.mxu0 0.0
        %1597 = vmatprep.subr.mxu0 0.0
        %1598 = vmatpush2.msra.mxu0 0.0
        %1599 = vmatprep.subr.mxu0 0.0
        %1600 = vmatpush2.msra.mxu0 0.0
        %1601 = vmatprep.subr.mxu0 0.0
        %1602 = vmatpush2.msra.mxu0 0.0
        %1603 = vmatprep.subr.mxu0 0.0
        %1604 = vmatpush2.msra.mxu0 0.0
        %1605 = vmatprep.subr.mxu0 0.0
        %1606 = vmatpush2.msra.mxu0 0.0
        %1607 = vmatprep.subr.mxu0 0.0
        %1608 = vmatpush2.msra.mxu0 0.0
        %1609 = vmatprep.mubr.f32.mxu0 0.0
        %1610 = vmatmul.mubr.f32.gmra.mxu0 %v1543
        %v1611 = vpop.f32.mrf.mxu0
        %v1612 = vadd.f32 0.0, %v1611
        %v1613 = vpop.f32.mrf.mxu0
        %1614 = vdwg.mxu0
        %v1616 = vsel %vm1182, %v1539, 0
        %1618 = vmatprep.subr.mxu0 0.0
        %1619 = vmatpush1.msra.mxu0 0.0
        %1620 = vmatprep.subr.mxu0 0.0
        %1621 = vmatpush1.msra.mxu0 0.0
        %1622 = vmatprep.subr.mxu0 0.0
        %1623 = vmatpush1.msra.mxu0 0.0
        %1624 = vmatprep.subr.mxu0 0.0
        %1625 = vmatpush1.msra.mxu0 0.0
        %1626 = vmatprep.subr.mxu0 0.0
        %1627 = vmatpush1.msra.mxu0 0.0
        %1628 = vmatprep.subr.mxu0 0.0
        %1629 = vmatpush1.msra.mxu0 0.0
        %1630 = vmatprep.subr.mxu0 0.0
        %1631 = vmatpush1.msra.mxu0 0.0
        %1632 = vmatprep.subr.mxu0 0.0
        %1633 = vmatpush1.msra.mxu0 0.0
        %1634 = vmatprep.subr.mxu0 0.0
        %1635 = vmatpush1.msra.mxu0 0.0
        %1636 = vmatprep.subr.mxu0 0.0
        %1637 = vmatpush1.msra.mxu0 0.0
        %1638 = vmatprep.subr.mxu0 0.0
        %1639 = vmatpush1.msra.mxu0 0.0
        %1640 = vmatprep.subr.mxu0 0.0
        %1641 = vmatpush1.msra.mxu0 0.0
        %1642 = vmatprep.subr.mxu0 0.0
        %1643 = vmatpush1.msra.mxu0 0.0
        %1644 = vmatprep.subr.mxu0 0.0
        %1645 = vmatpush1.msra.mxu0 0.0
        %1646 = vmatprep.subr.mxu0 0.0
        %1647 = vmatpush1.msra.mxu0 0.0
        %1648 = vmatprep.subr.mxu0 0.0
        %1649 = vmatpush1.msra.mxu0 %v1039
        %1650 = vmatprep.subr.mxu0 0.0
        %1651 = vmatpush2.msra.mxu0 0.0
        %1652 = vmatprep.subr.mxu0 0.0
        %1653 = vmatpush2.msra.mxu0 0.0
        %1654 = vmatprep.subr.mxu0 0.0
        %1655 = vmatpush2.msra.mxu0 0.0
        %1656 = vmatprep.subr.mxu0 0.0
        %1657 = vmatpush2.msra.mxu0 0.0
        %1658 = vmatprep.subr.mxu0 0.0
        %1659 = vmatpush2.msra.mxu0 0.0
        %1660 = vmatprep.subr.mxu0 0.0
        %1661 = vmatpush2.msra.mxu0 0.0
        %1662 = vmatprep.subr.mxu0 0.0
        %1663 = vmatpush2.msra.mxu0 0.0
        %1664 = vmatprep.subr.mxu0 0.0
        %1665 = vmatpush2.msra.mxu0 0.0
        %1666 = vmatprep.subr.mxu0 0.0
        %1667 = vmatpush2.msra.mxu0 0.0
        %1668 = vmatprep.subr.mxu0 0.0
        %1669 = vmatpush2.msra.mxu0 0.0
        %1670 = vmatprep.subr.mxu0 0.0
        %1671 = vmatpush2.msra.mxu0 0.0
        %1672 = vmatprep.subr.mxu0 0.0
        %1673 = vmatpush2.msra.mxu0 0.0
        %1674 = vmatprep.subr.mxu0 0.0
        %1675 = vmatpush2.msra.mxu0 0.0
        %1676 = vmatprep.subr.mxu0 0.0
        %1677 = vmatpush2.msra.mxu0 0.0
        %1678 = vmatprep.subr.mxu0 0.0
        %1679 = vmatpush2.msra.mxu0 0.0
        %1680 = vmatprep.subr.mxu0 0.0
        %1681 = vmatpush2.msra.mxu0 0.0
        %1682 = vmatprep.mubr.f32.mxu0 0.0
        %1683 = vmatmul.mubr.f32.gmra.mxu0 %v1616
        %v1684 = vpop.f32.mrf.mxu0
        %v1685 = vadd.f32 0.0, %v1684
        %v1686 = vpop.f32.mrf.mxu0
        %1687 = vdwg.mxu0
        %v1689 = vsel %vm1182, %v1540, 0
        %1691 = vmatprep.subr.mxu0 0.0
        %1692 = vmatpush1.msra.mxu0 0.0
        %1693 = vmatprep.subr.mxu0 0.0
        %1694 = vmatpush1.msra.mxu0 0.0
        %1695 = vmatprep.subr.mxu0 0.0
        %1696 = vmatpush1.msra.mxu0 0.0
        %1697 = vmatprep.subr.mxu0 0.0
        %1698 = vmatpush1.msra.mxu0 0.0
        %1699 = vmatprep.subr.mxu0 0.0
        %1700 = vmatpush1.msra.mxu0 0.0
        %1701 = vmatprep.subr.mxu0 0.0
        %1702 = vmatpush1.msra.mxu0 0.0
        %1703 = vmatprep.subr.mxu0 0.0
        %1704 = vmatpush1.msra.mxu0 0.0
        %1705 = vmatprep.subr.mxu0 0.0
        %1706 = vmatpush1.msra.mxu0 0.0
        %1707 = vmatprep.subr.mxu0 0.0
        %1708 = vmatpush1.msra.mxu0 0.0
        %1709 = vmatprep.subr.mxu0 0.0
        %1710 = vmatpush1.msra.mxu0 0.0
        %1711 = vmatprep.subr.mxu0 0.0
        %1712 = vmatpush1.msra.mxu0 0.0
        %1713 = vmatprep.subr.mxu0 0.0
        %1714 = vmatpush1.msra.mxu0 0.0
        %1715 = vmatprep.subr.mxu0 0.0
        %1716 = vmatpush1.msra.mxu0 0.0
        %1717 = vmatprep.subr.mxu0 0.0
        %1718 = vmatpush1.msra.mxu0 0.0
        %1719 = vmatprep.subr.mxu0 0.0
        %1720 = vmatpush1.msra.mxu0 0.0
        %1721 = vmatprep.subr.mxu0 0.0
        %1722 = vmatpush1.msra.mxu0 %v1109
        %1723 = vmatprep.subr.mxu0 0.0
        %1724 = vmatpush2.msra.mxu0 0.0
        %1725 = vmatprep.subr.mxu0 0.0
        %1726 = vmatpush2.msra.mxu0 0.0
        %1727 = vmatprep.subr.mxu0 0.0
        %1728 = vmatpush2.msra.mxu0 0.0
        %1729 = vmatprep.subr.mxu0 0.0
        %1730 = vmatpush2.msra.mxu0 0.0
        %1731 = vmatprep.subr.mxu0 0.0
        %1732 = vmatpush2.msra.mxu0 0.0
        %1733 = vmatprep.subr.mxu0 0.0
        %1734 = vmatpush2.msra.mxu0 0.0
        %1735 = vmatprep.subr.mxu0 0.0
        %1736 = vmatpush2.msra.mxu0 0.0
        %1737 = vmatprep.subr.mxu0 0.0
        %1738 = vmatpush2.msra.mxu0 0.0
        %1739 = vmatprep.subr.mxu0 0.0
        %1740 = vmatpush2.msra.mxu0 0.0
        %1741 = vmatprep.subr.mxu0 0.0
        %1742 = vmatpush2.msra.mxu0 0.0
        %1743 = vmatprep.subr.mxu0 0.0
        %1744 = vmatpush2.msra.mxu0 0.0
        %1745 = vmatprep.subr.mxu0 0.0
        %1746 = vmatpush2.msra.mxu0 0.0
        %1747 = vmatprep.subr.mxu0 0.0
        %1748 = vmatpush2.msra.mxu0 0.0
        %1749 = vmatprep.subr.mxu0 0.0
        %1750 = vmatpush2.msra.mxu0 0.0
        %1751 = vmatprep.subr.mxu0 0.0
        %1752 = vmatpush2.msra.mxu0 0.0
        %1753 = vmatprep.subr.mxu0 0.0
        %1754 = vmatpush2.msra.mxu0 0.0
        %1755 = vmatprep.mubr.f32.mxu0 0.0
        %1756 = vmatmul.mubr.f32.gmra.mxu0 %v1689
        %v1757 = vpop.f32.mrf.mxu0
        %v1758 = vadd.f32 0.0, %v1757
        %v1759 = vpop.f32.mrf.mxu0
        %1760 = vdwg.mxu0
        %v1762 = vsel %vm1182, %v1541, 0
        %1764 = vmatprep.subr.mxu0 0.0
        %1765 = vmatpush1.msra.mxu0 0.0
        %1766 = vmatprep.subr.mxu0 0.0
        %1767 = vmatpush1.msra.mxu0 0.0
        %1768 = vmatprep.subr.mxu0 0.0
        %1769 = vmatpush1.msra.mxu0 0.0
        %1770 = vmatprep.subr.mxu0 0.0
        %1771 = vmatpush1.msra.mxu0 0.0
        %1772 = vmatprep.subr.mxu0 0.0
        %1773 = vmatpush1.msra.mxu0 0.0
        %1774 = vmatprep.subr.mxu0 0.0
        %1775 = vmatpush1.msra.mxu0 0.0
        %1776 = vmatprep.subr.mxu0 0.0
        %1777 = vmatpush1.msra.mxu0 0.0
        %1778 = vmatprep.subr.mxu0 0.0
        %1779 = vmatpush1.msra.mxu0 0.0
        %1780 = vmatprep.subr.mxu0 0.0
        %1781 = vmatpush1.msra.mxu0 0.0
        %1782 = vmatprep.subr.mxu0 0.0
        %1783 = vmatpush1.msra.mxu0 0.0
        %1784 = vmatprep.subr.mxu0 0.0
        %1785 = vmatpush1.msra.mxu0 0.0
        %1786 = vmatprep.subr.mxu0 0.0
        %1787 = vmatpush1.msra.mxu0 0.0
        %1788 = vmatprep.subr.mxu0 0.0
        %1789 = vmatpush1.msra.mxu0 0.0
        %1790 = vmatprep.subr.mxu0 0.0
        %1791 = vmatpush1.msra.mxu0 0.0
        %1792 = vmatprep.subr.mxu0 0.0
        %1793 = vmatpush1.msra.mxu0 0.0
        %1794 = vmatprep.subr.mxu0 0.0
        %1795 = vmatpush1.msra.mxu0 %v1179
        %1796 = vmatprep.subr.mxu0 0.0
        %1797 = vmatpush2.msra.mxu0 0.0
        %1798 = vmatprep.subr.mxu0 0.0
        %1799 = vmatpush2.msra.mxu0 0.0
        %1800 = vmatprep.subr.mxu0 0.0
        %1801 = vmatpush2.msra.mxu0 0.0
        %1802 = vmatprep.subr.mxu0 0.0
        %1803 = vmatpush2.msra.mxu0 0.0
        %1804 = vmatprep.subr.mxu0 0.0
        %1805 = vmatpush2.msra.mxu0 0.0
        %1806 = vmatprep.subr.mxu0 0.0
        %1807 = vmatpush2.msra.mxu0 0.0
        %1808 = vmatprep.subr.mxu0 0.0
        %1809 = vmatpush2.msra.mxu0 0.0
        %1810 = vmatprep.subr.mxu0 0.0
        %1811 = vmatpush2.msra.mxu0 0.0
        %1812 = vmatprep.subr.mxu0 0.0
        %1813 = vmatpush2.msra.mxu0 0.0
        %1814 = vmatprep.subr.mxu0 0.0
        %1815 = vmatpush2.msra.mxu0 0.0
        %1816 = vmatprep.subr.mxu0 0.0
        %1817 = vmatpush2.msra.mxu0 0.0
        %1818 = vmatprep.subr.mxu0 0.0
        %1819 = vmatpush2.msra.mxu0 0.0
        %1820 = vmatprep.subr.mxu0 0.0
        %1821 = vmatpush2.msra.mxu0 0.0
        %1822 = vmatprep.subr.mxu0 0.0
        %1823 = vmatpush2.msra.mxu0 0.0
        %1824 = vmatprep.subr.mxu0 0.0
        %1825 = vmatpush2.msra.mxu0 0.0
        %1826 = vmatprep.subr.mxu0 0.0
        %1827 = vmatpush2.msra.mxu0 0.0
        %1828 = vmatprep.mubr.f32.mxu0 0.0
        %1829 = vmatmul.mubr.f32.gmra.mxu0 %v1762
        %v1830 = vpop.f32.mrf.mxu0
        %v1831 = vadd.f32 0.0, %v1830
        %v1832 = vpop.f32.mrf.mxu0
        %1833 = vdwg.mxu0
        %1834 = vst.msk [vmem:[#allocation2] sm:$0xff] %vm1182, %v1612
        %1836 = vrot.lane.b32.xlu0 %v1685, 8
        %v1837 = vpop.permute.xlu0 %1836
        %vm1839 = vcmask 130112
        %1840 = vst.msk [vmem:[#allocation2] sm:$0xff] %vm1839, %v1837
        %1842 = vrot.lane.b32.xlu0 %v1758, 16
        %v1843 = vpop.permute.xlu0 %1842
        %vm1845 = vcmask 195712
        %1846 = vst.msk [vmem:[#allocation2] sm:$0xff] %vm1845, %v1843
        %1848 = vrot.lane.b32.xlu0 %v1831, 24
        %v1849 = vpop.permute.xlu0 %1848
        %vm1851 = vcmask 261312
        %1852 = vst.msk [vmem:[#allocation2] sm:$0xff] %vm1851, %v1849
        %v1853 = vld [vmem:[#allocation2] sm:$0xff]
        %v1854 = vld [vmem:[%s5] sm:$0xff]
        %v1855 = vld [vmem:[%s5 + $0x8] sm:$0xff]
        %v1856 = vld [vmem:[%s5 + $0x10] sm:$0xff]
        %v1857 = vld [vmem:[%s5 + $0x18] sm:$0xff]
        %v1859 = vsel %vm303, %v1853, 0
        %1861 = vmatprep.subr.mxu0 0.0
        %1862 = vmatpush1.msra.mxu0 0.0
        %1863 = vmatprep.subr.mxu0 0.0
        %1864 = vmatpush1.msra.mxu0 0.0
        %1865 = vmatprep.subr.mxu0 0.0
        %1866 = vmatpush1.msra.mxu0 0.0
        %1867 = vmatprep.subr.mxu0 0.0
        %1868 = vmatpush1.msra.mxu0 0.0
        %1869 = vmatprep.subr.mxu0 0.0
        %1870 = vmatpush1.msra.mxu0 0.0
        %1871 = vmatprep.subr.mxu0 0.0
        %1872 = vmatpush1.msra.mxu0 0.0
        %1873 = vmatprep.subr.mxu0 0.0
        %1874 = vmatpush1.msra.mxu0 0.0
        %1875 = vmatprep.subr.mxu0 0.0
        %1876 = vmatpush1.msra.mxu0 0.0
        %1877 = vmatprep.subr.mxu0 0.0
        %1878 = vmatpush1.msra.mxu0 0.0
        %1879 = vmatprep.subr.mxu0 0.0
        %1880 = vmatpush1.msra.mxu0 0.0
        %1881 = vmatprep.subr.mxu0 0.0
        %1882 = vmatpush1.msra.mxu0 0.0
        %1883 = vmatprep.subr.mxu0 0.0
        %1884 = vmatpush1.msra.mxu0 0.0
        %1885 = vmatprep.subr.mxu0 0.0
        %1886 = vmatpush1.msra.mxu0 %v1857
        %1887 = vmatprep.subr.mxu0 0.0
        %1888 = vmatpush1.msra.mxu0 %v1856
        %1889 = vmatprep.subr.mxu0 0.0
        %1890 = vmatpush1.msra.mxu0 %v1855
        %1891 = vmatprep.subr.mxu0 0.0
        %1892 = vmatpush1.msra.mxu0 %v1854
        %1893 = vmatprep.subr.mxu0 0.0
        %1894 = vmatpush2.msra.mxu0 0.0
        %1895 = vmatprep.subr.mxu0 0.0
        %1896 = vmatpush2.msra.mxu0 0.0
        %1897 = vmatprep.subr.mxu0 0.0
        %1898 = vmatpush2.msra.mxu0 0.0
        %1899 = vmatprep.subr.mxu0 0.0
        %1900 = vmatpush2.msra.mxu0 0.0
        %1901 = vmatprep.subr.mxu0 0.0
        %1902 = vmatpush2.msra.mxu0 0.0
        %1903 = vmatprep.subr.mxu0 0.0
        %1904 = vmatpush2.msra.mxu0 0.0
        %1905 = vmatprep.subr.mxu0 0.0
        %1906 = vmatpush2.msra.mxu0 0.0
        %1907 = vmatprep.subr.mxu0 0.0
        %1908 = vmatpush2.msra.mxu0 0.0
        %1909 = vmatprep.subr.mxu0 0.0
        %1910 = vmatpush2.msra.mxu0 0.0
        %1911 = vmatprep.subr.mxu0 0.0
        %1912 = vmatpush2.msra.mxu0 0.0
        %1913 = vmatprep.subr.mxu0 0.0
        %1914 = vmatpush2.msra.mxu0 0.0
        %1915 = vmatprep.subr.mxu0 0.0
        %1916 = vmatpush2.msra.mxu0 0.0
        %1917 = vmatprep.subr.mxu0 0.0
        %1918 = vmatpush2.msra.mxu0 0.0
        %1919 = vmatprep.subr.mxu0 0.0
        %1920 = vmatpush2.msra.mxu0 0.0
        %1921 = vmatprep.subr.mxu0 0.0
        %1922 = vmatpush2.msra.mxu0 0.0
        %1923 = vmatprep.subr.mxu0 0.0
        %1924 = vmatpush2.msra.mxu0 0.0
        %1925 = vmatprep.mubr.f32.mxu0 0.0
        %1926 = vmatmul.mubr.f32.gmra.mxu0 %v1859
        %v1927 = vpop.f32.mrf.mxu0
        %v1928 = vadd.f32 0.0, %v1927
        %v1929 = vpop.f32.mrf.mxu0
        %1930 = vdwg.mxu0
        %v1931 = vadd.f32 %v284, %v1928
        %1932 = vst.msk [vmem:[%s279] sm:$0xff] %vm303, %v1931
        %s1933 = sand.u32 %s167, 1
        %s1934 = scalar_lea.sflag [#allocation5], %s1933
        %s1935 = sand.u32 %s167, 1
        %s1936 = smul.addr %s1935, 8
        %s1937 = scalar_lea.vmem [#allocation6], %s1936
        // Predicated region
        $region49: #{attn_only_block.1} parent=43 // pred_check
          %p1938 = pneg %p177
        $region50: #{attn_only_block.1} parent=43 // pred_check_branch
          %1940 = sbr.rel (%p1938) target = $region52
        $region51: #{attn_only_block.1} parent=43 // pred_region
          %s1942 = ssub.s32 128, 128
          %1943 = vsyncadd %s1934, %s1942
          %s1944 = smul.addr %s23, 128
          %s1945 = scalar_lea.hbm %s6, %s1944
          %s1947 = sshll.u32 %s1937, 4
          %s1948 = int_to_ptr.vmem [resolvable:$true] %s1947
          %1950 = dma.vmem_to_hbm [thread:$0]  %s1948, 128, %s1945, %s1934
        $region52: #{attn_only_block.1} parent=43 // pred_fallthru
          _
      $region44: #{attn_only_block.1} parent=5 // pred_fallthru
        _
      %p1951 = scmp.le.s32.totalorder 2, %s18
      // Predicated region
      $region53: #{attn_only_block.1} parent=5 // pred_check
        %p1952 = pneg %p1951
      $region54: #{attn_only_block.1} parent=5 // pred_check_branch
        %1954 = sbr.rel (%p1952) target = $region56
      $region55: #{attn_only_block.1} parent=5 // pred_region
        %s1955 = ssub.s32 %s18, 2
        // Predicated region
        $region57: #{attn_only_block.1} parent=55 // pred_check
          %p1956 = pneg %p183
        $region58: #{attn_only_block.1} parent=55 // pred_check_branch
          %1958 = sbr.rel (%p1956) target = $region60
        $region59: #{attn_only_block.1} parent=55 // pred_region
          %s1959 = sand.u32 %s168, 1
          %s1960 = scalar_lea.sflag [#allocation5], %s1959
          %s1961 = sand.u32 %s168, 1
          %s1962 = smul.addr %s1961, 8
          %s1963 = scalar_lea.vmem [#allocation6], %s1962
          %1964 = dma.done %s1960, 128
        $region60: #{attn_only_block.1} parent=55 // pred_fallthru
          _
      $region56: #{attn_only_block.1} parent=5 // pred_fallthru
        _
    $region6: #{attn_only_block.1} parent=1 // loop_footer
      %s22 = sadd.s32 1, %s18
    $region7: #{attn_only_block.1} parent=1 // loop_footer_branch
      %17 = sbr.rel target = $region3
    $region8: #{attn_only_block.1} parent=1 // loop_exit
      _
    %1965 = vsyncpa [#allocation4], 1
    %s1966 = scalar_lea.sflag [#allocation4], 1
    %1967 = vsyncpa %s1966, 1
    %1968 = vsyncpa [#allocation5], 1
    %s1969 = scalar_lea.sflag [#allocation5], 1
    %1970 = vsyncpa %s1969, 1

</llo_original>
